<compile_context>
chip_gen: v6e
topology: v6e:2x2x1
jax: 0.10.0
libtpu: 0.0.40
codegen_flags: <defaults>
</compile_context>

<pallas_src>
import functools

import jax
import jax.numpy as jnp
from jax.experimental import pallas as pl
from jax.experimental.pallas import tpu as pltpu


# =============================================================================
# Kernels
# =============================================================================
def _grouped_linear_kernel(x_ref, w_ref, b_ref, o_ref, *, tanh_input):
    """One group: y = (tanh(x) if tanh_input else x) @ w + b.

    x_ref: (1, M, K) f32, w_ref: (1, K, N) bf16, b_ref: (1, 1, N) f32,
    o_ref: (1, M, N) f32.  MXU matmul in bf16 with f32 accumulation; the
    element-wise math stays f32.
    """
    x = x_ref[0]
    if tanh_input:
        x = jnp.tanh(x)
    acc = jnp.dot(x.astype(jnp.bfloat16), w_ref[0],
                  preferred_element_type=jnp.float32)
    o_ref[0] = (acc + b_ref[0]).astype(o_ref.dtype)


def grouped_linear(x, w, b, *, tanh_input=False):
    """G independent linears in a single pallas_call (group axis is 'parallel').

    x: (Gx, M, K) f32 with Gx in {1, G}  (Gx == 1 -> input shared by all groups)
    w: (G, K, N) bf16, b: (G, 1, N) f32  ->  (G, M, N) f32
    """
    gx, m, k = x.shape
    g, _, n = w.shape
    x_map = (lambda i: (0, 0, 0)) if gx == 1 else (lambda i: (i, 0, 0))
    return pl.pallas_call(
        functools.partial(_grouped_linear_kernel, tanh_input=tanh_input),
        out_shape=jax.ShapeDtypeStruct((g, m, n), jnp.float32),
        grid=(g,),
        in_specs=[pl.BlockSpec((1, m, k), x_map),
                  pl.BlockSpec((1, k, n), lambda i: (i, 0, 0)),
                  pl.BlockSpec((1, 1, n), lambda i: (i, 0, 0))],
        out_specs=pl.BlockSpec((1, m, n), lambda i: (i, 0, 0)),
        compiler_params=pltpu.CompilerParams(
            dimension_semantics=("parallel",)),
    )(x, w, b)


def _linear_vtile_kernel(x_ref, w_ref, b_ref, o_ref):
    acc = jnp.dot(x_ref[...].astype(jnp.bfloat16), w_ref[...],
                  preferred_element_type=jnp.float32)
    o_ref[...] = (acc + b_ref[...]).astype(o_ref.dtype)


def linear_vtile(x, w, b, *, tile_n=1024):
    """y = x @ w + b, tiled over the (possibly large) output/vocab dimension.

    x: (M, K) f32, w: (K, N) bf16 with N a multiple of 128, b: (1, N) f32.
    Keeps per-step VMEM bounded so the kernel stays pipelined and portable
    across v5e/v6e (128 MiB VMEM) and v7x (64 MiB VMEM).
    """
    m, k = x.shape
    n = w.shape[-1]
    assert n % 128 == 0, "pad the vocab dimension to a multiple of 128"
    tile_n = min(tile_n, n)
    return pl.pallas_call(
        _linear_vtile_kernel,
        out_shape=jax.ShapeDtypeStruct((m, n), jnp.float32),
        grid=(pl.cdiv(n, tile_n),),
        in_specs=[pl.BlockSpec((m, k), lambda j: (0, 0)),
                  pl.BlockSpec((k, tile_n), lambda j: (0, j)),
                  pl.BlockSpec((1, tile_n), lambda j: (0, j))],
        out_specs=pl.BlockSpec((m, tile_n), lambda j: (0, j)),
        compiler_params=pltpu.CompilerParams(
            dimension_semantics=("parallel",),
            vmem_limit_bytes=32 * 1024 * 1024),
    )(x, w, b)


def _gru_step_kernel(rev_ref, gi_ref, w_hh_ref, b_hhn_ref, out_ref, h_ref):
    """One GRU time step for one of the stacked GRUs.  Grid = (group, time).

    gi_ref   : (1, 1, N, 3H) f32  precomputed x@W_ih + b_ih (+ b_hh_{r,z} folded)
    w_hh_ref : (1, H, 3H)    bf16 hidden weights, gate order (r, z, n)
    b_hhn_ref: (1, 1, H)     f32  hidden bias of the candidate gate only
    out_ref  : (1, 1, N, H)  f32  hidden state written at this time index
    h_ref    : (N, H)        f32  carried hidden state (VMEM scratch)
    """
    del rev_ref  # only used by the index maps
    t = pl.program_id(1)

    @pl.when(t == 0)
    def _():
        h_ref[...] = jnp.zeros_like(h_ref)   # h0 == 0 (no h0 input / DMA stream)

    h = h_ref[...]                           # (N, H)
    gi = gi_ref[0, 0]                        # (N, 3H)
    hd = h.shape[-1]
    gh = jnp.dot(h.astype(jnp.bfloat16), w_hh_ref[0],
                 preferred_element_type=jnp.float32)          # (N, 3H)
    r = jax.nn.sigmoid(gi[:, :hd] + gh[:, :hd])
    z = jax.nn.sigmoid(gi[:, hd:2 * hd] + gh[:, hd:2 * hd])
    n = jnp.tanh(gi[:, 2 * hd:] + r * (gh[:, 2 * hd:] + b_hhn_ref[0]))
    h_new = (1.0 - z) * n + z * h
    h_ref[...] = h_new
    out_ref[0, 0] = h_new.astype(out_ref.dtype)


def gru_scan_grouped(gi, w_hh, b_hhn, rev):
    """Run G independent single-layer GRUs over time in ONE pallas_call.

    gi   : (G, T, N, 3H) f32 hoisted input projections (gate order r, z, n)
    w_hh : (G, H, 3H) bf16, b_hhn: (G, 1, H) f32
    rev  : (G,) int32; 1 => out = gru(x[::-1])[::-1], implemented purely in the
           index maps (no reversed HBM copies).
    Returns (G, T, N, H) f32.
    """
    g_dim, t_dim, n_dim, three_h = gi.shape
    hidden = three_h // 3

    def t_idx(g, t, rev_ref):
        # forward: t ; reversed: T-1-t  (read and write at the same index)
        return t + rev_ref[g] * (t_dim - 1 - 2 * t)

    return pl.pallas_call(
        _gru_step_kernel,
        out_shape=jax.ShapeDtypeStruct((g_dim, t_dim, n_dim, hidden), jnp.float32),
        grid_spec=pltpu.PrefetchScalarGridSpec(
            num_scalar_prefetch=1,
            grid=(g_dim, t_dim),
            in_specs=[
                pl.BlockSpec((1, 1, n_dim, three_h),
                             lambda g, t, rev: (g, t_idx(g, t, rev), 0, 0)),
                pl.BlockSpec((1, hidden, three_h), lambda g, t, rev: (g, 0, 0)),
                pl.BlockSpec((1, 1, hidden), lambda g, t, rev: (g, 0, 0)),
            ],
            out_specs=pl.BlockSpec((1, 1, n_dim, hidden),
                                   lambda g, t, rev: (g, t_idx(g, t, rev), 0, 0)),
            scratch_shapes=[pltpu.VMEM((n_dim, hidden), jnp.float32)],
        ),
        compiler_params=pltpu.CompilerParams(
            # group axis independent -> shardable across v7x's 2 TensorCores;
            # time axis carries the recurrence -> "arbitrary".
            dimension_semantics=("parallel", "arbitrary")),
    )(rev, gi, w_hh, b_hhn)


# =============================================================================
# Module forward (glue in plain JAX, hot paths in Pallas)
# =============================================================================
def enc_network_forward(params, reviews, review_lens, user_ids, item_ids):
    del user_ids, item_ids                      # unused by the reference forward()
    emb = params["embedding"]                   # (V, E) f32
    batch, seq = reviews.shape
    vocab, emb_dim = emb.shape                  # static shapes (fixes tracer bug)

    x = emb[reviews]                            # (B, S, E) embedding gather (glue)
    x2d = x.reshape(batch * seq, emb_dim)

    # --- encoders: hoisted input projection for all 4 GRU directions (1 call) ---
    gi_enc = grouped_linear(x2d[None], params["enc_w_ih"], params["enc_b_gi"])
    gi_enc = gi_enc.reshape(4, batch, seq, -1)  # (4, T=B, N=S, 3H)

    # --- 4 independent GRU recurrences, stacked, megacore-parallel group axis ---
    out_enc = gru_scan_grouped(gi_enc, params["enc_w_hh"], params["enc_b_hhn"],
                               params["enc_rev"])              # (4, B, S, H)
    hidden = out_enc.shape[-1]

    rows = jnp.arange(batch)
    last_t = review_lens - 1
    last_user = jnp.concatenate(
        [out_enc[0, rows, last_t], out_enc[1, rows, last_t]], axis=-1)   # (B, 2H)
    last_item = jnp.concatenate(
        [out_enc[2, rows, last_t], out_enc[3, rows, last_t]], axis=-1)   # (B, 2H)

    # --- hidden -> latent for user & item, fused into one grouped call ---
    latents = grouped_linear(jnp.stack([last_user, last_item], axis=0),
                             params["h2l_w"], params["h2l_b"])           # (2, B, L)

    # --- decoders: de_hidden = Linear(tanh(latent)) (tanh fused in kernel) ---
    de_hidden = grouped_linear(latents, params["l2o_w"], params["l2o_b"],
                               tanh_input=True)                          # (2, B, E)
    out_emb = x[None] + de_hidden[:, :, None, :]                         # (2, B, S, E)

    gi_dec = grouped_linear(out_emb.reshape(2, batch * seq, emb_dim),
                            params["dec_w_ih"], params["dec_b_gi"])
    gi_dec = gi_dec.reshape(2, batch, seq, -1)
    out_dec = gru_scan_grouped(gi_dec, params["dec_w_hh"], params["dec_b_hhn"],
                               params["dec_rev"])                        # (2, B, S, H)

    # --- shared output -> vocab head: user & item logits in ONE tiled call ---
    logits = linear_vtile(out_dec.reshape(2 * batch * seq, hidden),
                          params["o2v_w"], params["o2v_b"])
    logits = logits[:, :vocab]                                           # drop pad
    return logits[:batch * seq], logits[batch * seq:]


# =============================================================================
# Deterministic parameter construction (packed for the fused kernels)
# =============================================================================
def _round_up(x, m):
    return (x + m - 1) // m * m


def _uniform(key, shape, scale, dtype=jnp.float32):
    return jax.random.uniform(key, shape, jnp.float32, -scale, scale).astype(dtype)


def _make_gru_packed(key, in_dim, hidden):
    """One GRU cell packed for the hoisted/fused kernels (gate order r, z, n)."""
    k1, k2, k3, k4 = jax.random.split(key, 4)
    s = 1.0 / hidden ** 0.5
    w_ih = _uniform(k1, (in_dim, 3 * hidden), s)
    w_hh = _uniform(k2, (hidden, 3 * hidden), s)
    b_ih = _uniform(k3, (1, 3 * hidden), s)
    b_hh = _uniform(k4, (1, 3 * hidden), s)
    # Fold b_hh_r / b_hh_z into the hoisted input-projection bias; b_hh_n stays
    # separate because n = tanh(gi_n + r * (h @ W_hn + b_hn)).
    b_gi = b_ih + jnp.concatenate(
        [b_hh[:, :2 * hidden], jnp.zeros((1, hidden), jnp.float32)], axis=-1)
    return dict(w_ih=w_ih.astype(jnp.bfloat16),
                w_hh=w_hh.astype(jnp.bfloat16),
                b_gi=b_gi,
                b_hhn=b_hh[:, 2 * hidden:])


def _make_head(key, k_dim, n_dim):
    k1, k2 = jax.random.split(key)
    s = 1.0 / k_dim ** 0.5
    return _uniform(k1, (k_dim, n_dim), s, jnp.bfloat16), _uniform(k2, (1, n_dim), s)


def make_params(key, vocab, emb_dim, hidden, latent):
    assert emb_dim == hidden, "reference GRU requires embedding_size == hidden_size"
    ks = jax.random.split(key, 6)

    # 4 encoder GRU directions: [user_fwd, user_bwd, item_fwd, item_bwd]
    enc = [_make_gru_packed(k, emb_dim, hidden) for k in jax.random.split(ks[0], 4)]
    # 2 decoder GRUs: [user, item]
    dec = [_make_gru_packed(k, emb_dim, hidden) for k in jax.random.split(ks[1], 2)]

    h2l = [_make_head(k, 2 * hidden, latent) for k in jax.random.split(ks[2], 2)]
    l2o = [_make_head(k, latent, emb_dim) for k in jax.random.split(ks[3], 2)]

    # Shared output->vocab head, padded to a lane-dense multiple of 128 columns.
    vocab_pad = _round_up(vocab, 128)
    o2v_w, o2v_b = _make_head(ks[4], hidden, vocab)
    o2v_w = jnp.zeros((hidden, vocab_pad), jnp.bfloat16).at[:, :vocab].set(o2v_w)
    o2v_b = jnp.zeros((1, vocab_pad), jnp.float32).at[:, :vocab].set(o2v_b)

    stack = lambda ps, name: jnp.stack([p[name] for p in ps], axis=0)
    return dict(
        embedding=jax.random.normal(ks[5], (vocab, emb_dim), jnp.float32),
        enc_w_ih=stack(enc, "w_ih"), enc_b_gi=stack(enc, "b_gi"),
        enc_w_hh=stack(enc, "w_hh"), enc_b_hhn=stack(enc, "b_hhn"),
        enc_rev=jnp.array([0, 1, 0, 1], jnp.int32),
        dec_w_ih=stack(dec, "w_ih"), dec_b_gi=stack(dec, "b_gi"),
        dec_w_hh=stack(dec, "w_hh"), dec_b_hhn=stack(dec, "b_hhn"),
        dec_rev=jnp.array([0, 0], jnp.int32),
        h2l_w=jnp.stack([w for w, _ in h2l]), h2l_b=jnp.stack([b for _, b in h2l]),
        l2o_w=jnp.stack([w for w, _ in l2o]), l2o_b=jnp.stack([b for _, b in l2o]),
        o2v_w=o2v_w, o2v_b=o2v_b,
    )


# =============================================================================
if __name__ == "__main__":
    VOCAB = 50
    HIDDEN = 32          # == embedding_size (required by the reference GRU)
    LATENT = 16
    BATCH = 2
    SEQ = 8
    USER_SIZE = 6
    ITEM_SIZE = 7

    root = jax.random.PRNGKey(0)
    k_param, k_rev, k_len, k_uid, k_iid = jax.random.split(root, 5)

    params = make_params(k_param, VOCAB, HIDDEN, HIDDEN, LATENT)

    reviews = jax.random.randint(k_rev, (BATCH, SEQ), 0, VOCAB, dtype=jnp.int32)
    review_lens = jax.random.randint(k_len, (BATCH,), 1, SEQ + 1, dtype=jnp.int32)
    user_ids = jax.random.randint(k_uid, (BATCH,), 0, USER_SIZE, dtype=jnp.int32)
    item_ids = jax.random.randint(k_iid, (BATCH,), 0, ITEM_SIZE, dtype=jnp.int32)

    user_logits, item_logits = jax.jit(enc_network_forward)(
        params, reviews, review_lens, user_ids, item_ids)
    jax.block_until_ready((user_logits, item_logits))

    assert user_logits.shape == (BATCH * SEQ, VOCAB), user_logits.shape
    assert item_logits.shape == (BATCH * SEQ, VOCAB), item_logits.shape
    assert bool(jnp.all(jnp.isfinite(user_logits)))
    assert bool(jnp.all(jnp.isfinite(item_logits)))

    print("KERNEL_OK")
</pallas_src>

<mosaic_0001>
module attributes {stable_mosaic.version = 11 : i64} {
  func.func @_gru_step_kernel(%arg0: i32, %arg1: i32, %arg2: memref<4xi32, #tpu.memory_space<smem>>, %arg3: memref<1x1x8x96xf32, #tpu.memory_space<vmem>>, %arg4: memref<1x32x96xbf16, #tpu.memory_space<vmem>>, %arg5: memref<1x1x32xf32, #tpu.memory_space<vmem>>, %arg6: memref<1x1x8x32xf32, #tpu.memory_space<vmem>>, %arg7: memref<8x32xf32, #tpu.memory_space<vmem>>) attributes {dimension_semantics = [#tpu.dimension_semantics<parallel>, #tpu.dimension_semantics<arbitrary>], iteration_bounds = array<i64: 4, 2>, scalar_prefetch = 1 : i64, scratch_operands = 1 : i64, tpu.core_type = #tpu.core_type<tc>, window_params = [{transform_indices = @transform_0, window_bounds = array<i64: 1, 1, 8, 96>}, {transform_indices = @transform_1, window_bounds = array<i64: 1, 32, 96>}, {transform_indices = @transform_2, window_bounds = array<i64: 1, 1, 32>}, {transform_indices = @transform_3, window_bounds = array<i64: 1, 1, 8, 32>}]} {
    %c0_i32 = arith.constant 0 : i32
    %0 = arith.cmpi eq, %arg1, %c0_i32 : i32
    %1 = arith.extui %0 : i1 to i32
    %c0_i32_0 = arith.constant 0 : i32
    %2 = arith.cmpi ne, %1, %c0_i32_0 : i32
    scf.if %2 {
      %cst_21 = arith.constant 0.000000e+00 : f32
      %44 = vector.broadcast %cst_21 : f32 to vector<8x32xf32>
      %c0_22 = arith.constant 0 : index
      %c0_23 = arith.constant 0 : index
      %45 = vector.load %arg7[%c0_22, %c0_23] : memref<8x32xf32, #tpu.memory_space<vmem>>, vector<8x32xf32>
      tpu.vector_store %arg7[%c0_22, %c0_23], %44 {strides = array<i32>} : memref<8x32xf32, #tpu.memory_space<vmem>>, vector<8x32xf32>,
    } else {
    }
    %c0 = arith.constant 0 : index
    %c0_1 = arith.constant 0 : index
    %3 = vector.load %arg7[%c0, %c0_1] : memref<8x32xf32, #tpu.memory_space<vmem>>, vector<8x32xf32>
    %c0_2 = arith.constant 0 : index
    %c0_3 = arith.constant 0 : index
    %c0_4 = arith.constant 0 : index
    %c0_5 = arith.constant 0 : index
    %4 = vector.load %arg3[%c0_2, %c0_3, %c0_4, %c0_5] : memref<1x1x8x96xf32, #tpu.memory_space<vmem>>, vector<1x1x8x96xf32>
    %5 = vector.shape_cast %4 : vector<1x1x8x96xf32> to vector<8x96xf32>
    %6 = arith.truncf %3 : vector<8x32xf32> to vector<8x32xbf16>
    %c0_6 = arith.constant 0 : index
    %c0_7 = arith.constant 0 : index
    %c0_8 = arith.constant 0 : index
    %7 = vector.load %arg4[%c0_6, %c0_7, %c0_8] : memref<1x32x96xbf16, #tpu.memory_space<vmem>>, vector<1x32x96xbf16>
    %8 = vector.shape_cast %7 : vector<1x32x96xbf16> to vector<32x96xbf16>
    %cst = arith.constant dense<0.000000e+00> : vector<8x96xf32>
    %9 = tpu.matmul %6, %8, %cst {dimension_numbers = #tpu.dot_dimension_numbers<[1], [0], [0], [1], [0, 0, 1, 1], [], []>} : vector<8x32xbf16>, vector<32x96xbf16>, vector<8x96xf32> -> vector<8x96xf32>
    %10 = vector.extract_strided_slice %5 {offsets = [0, 0], sizes = [8, 32], strides = [1, 1]} : vector<8x96xf32> to vector<8x32xf32>
    %11 = vector.extract_strided_slice %9 {offsets = [0, 0], sizes = [8, 32], strides = [1, 1]} : vector<8x96xf32> to vector<8x32xf32>
    %12 = arith.addf %10, %11 : vector<8x32xf32>
    %13 = arith.negf %12 : vector<8x32xf32>
    %14 = math.exp %13 : vector<8x32xf32>
    %cst_9 = arith.constant 1.000000e+00 : f32
    %15 = vector.broadcast %cst_9 : f32 to vector<8x32xf32>
    %16 = arith.addf %15, %14 : vector<8x32xf32>
    %17 = arith.divf %15, %16 : vector<8x32xf32>
    %18 = vector.extract_strided_slice %5 {offsets = [0, 32], sizes = [8, 32], strides = [1, 1]} : vector<8x96xf32> to vector<8x32xf32>
    %19 = vector.extract_strided_slice %9 {offsets = [0, 32], sizes = [8, 32], strides = [1, 1]} : vector<8x96xf32> to vector<8x32xf32>
    %20 = arith.addf %18, %19 : vector<8x32xf32>
    %21 = arith.negf %20 : vector<8x32xf32>
    %22 = math.exp %21 : vector<8x32xf32>
    %cst_10 = arith.constant 1.000000e+00 : f32
    %23 = vector.broadcast %cst_10 : f32 to vector<8x32xf32>
    %24 = arith.addf %23, %22 : vector<8x32xf32>
    %25 = arith.divf %23, %24 : vector<8x32xf32>
    %26 = vector.extract_strided_slice %5 {offsets = [0, 64], sizes = [8, 32], strides = [1, 1]} : vector<8x96xf32> to vector<8x32xf32>
    %27 = vector.extract_strided_slice %9 {offsets = [0, 64], sizes = [8, 32], strides = [1, 1]} : vector<8x96xf32> to vector<8x32xf32>
    %c0_11 = arith.constant 0 : index
    %c0_12 = arith.constant 0 : index
    %c0_13 = arith.constant 0 : index
    %28 = vector.load %arg5[%c0_11, %c0_12, %c0_13] : memref<1x1x32xf32, #tpu.memory_space<vmem>>, vector<1x1x32xf32>
    %29 = vector.shape_cast %28 : vector<1x1x32xf32> to vector<1x32xf32>
    %30 = vector.broadcast %29 : vector<1x32xf32> to vector<8x32xf32>
    %31 = arith.addf %27, %30 : vector<8x32xf32>
    %32 = arith.mulf %17, %31 : vector<8x32xf32>
    %33 = arith.addf %26, %32 : vector<8x32xf32>
    %34 = math.tanh %33 : vector<8x32xf32>
    %cst_14 = arith.constant 1.000000e+00 : f32
    %35 = vector.broadcast %cst_14 : f32 to vector<8x32xf32>
    %36 = arith.subf %35, %25 : vector<8x32xf32>
    %37 = arith.mulf %36, %34 : vector<8x32xf32>
    %38 = arith.mulf %25, %3 : vector<8x32xf32>
    %39 = arith.addf %37, %38 : vector<8x32xf32>
    %c0_15 = arith.constant 0 : index
    %c0_16 = arith.constant 0 : index
    %40 = vector.load %arg7[%c0_15, %c0_16] : memref<8x32xf32, #tpu.memory_space<vmem>>, vector<8x32xf32>
    tpu.vector_store %arg7[%c0_15, %c0_16], %39 {strides = array<i32>} : memref<8x32xf32, #tpu.memory_space<vmem>>, vector<8x32xf32>,
    %c0_17 = arith.constant 0 : index
    %c0_18 = arith.constant 0 : index
    %c0_19 = arith.constant 0 : index
    %c0_20 = arith.constant 0 : index
    %41 = vector.load %arg6[%c0_17, %c0_18, %c0_19, %c0_20] : memref<1x1x8x32xf32, #tpu.memory_space<vmem>>, vector<1x1x8x32xf32>
    %42 = vector.shape_cast %41 : vector<1x1x8x32xf32> to vector<8x32xf32>
    %43 = vector.shape_cast %39 : vector<8x32xf32> to vector<1x1x8x32xf32>
    tpu.vector_store %arg6[%c0_17, %c0_18, %c0_19, %c0_20], %43 {strides = array<i32>} : memref<1x1x8x32xf32, #tpu.memory_space<vmem>>, vector<1x1x8x32xf32>,
    return
  }
  func.func @transform_0(%arg0: i32, %arg1: i32, %arg2: memref<4xi32, #tpu.memory_space<smem>>) -> (i32, i32, i32, i32) {
    %0 = arith.index_cast %arg0 : i32 to index
    %1 = memref.load %arg2[%0] : memref<4xi32, #tpu.memory_space<smem>>
    %c2_i32 = arith.constant 2 : i32
    %2 = arith.muli %c2_i32, %arg1 : i32
    %c1_i32 = arith.constant 1 : i32
    %3 = arith.subi %c1_i32, %2 : i32
    %4 = arith.muli %1, %3 : i32
    %5 = arith.addi %arg1, %4 : i32
    %c0_i32 = arith.constant 0 : i32
    %c0_i32_0 = arith.constant 0 : i32
    %c0_i32_1 = arith.constant 0 : i32
    return %arg0, %5, %c0_i32, %c0_i32_0 : i32, i32, i32, i32
  }
  func.func @transform_1(%arg0: i32, %arg1: i32, %arg2: memref<4xi32, #tpu.memory_space<smem>>) -> (i32, i32, i32) {
    %c0_i32 = arith.constant 0 : i32
    %c0_i32_0 = arith.constant 0 : i32
    %c0_i32_1 = arith.constant 0 : i32
    return %arg0, %c0_i32, %c0_i32_0 : i32, i32, i32
  }
  func.func @transform_2(%arg0: i32, %arg1: i32, %arg2: memref<4xi32, #tpu.memory_space<smem>>) -> (i32, i32, i32) {
    %c0_i32 = arith.constant 0 : i32
    %c0_i32_0 = arith.constant 0 : i32
    %c0_i32_1 = arith.constant 0 : i32
    return %arg0, %c0_i32, %c0_i32_0 : i32, i32, i32
  }
  func.func @transform_3(%arg0: i32, %arg1: i32, %arg2: memref<4xi32, #tpu.memory_space<smem>>) -> (i32, i32, i32, i32) {
    %0 = arith.index_cast %arg0 : i32 to index
    %1 = memref.load %arg2[%0] : memref<4xi32, #tpu.memory_space<smem>>
    %c2_i32 = arith.constant 2 : i32
    %2 = arith.muli %c2_i32, %arg1 : i32
    %c1_i32 = arith.constant 1 : i32
    %3 = arith.subi %c1_i32, %2 : i32
    %4 = arith.muli %1, %3 : i32
    %5 = arith.addi %arg1, %4 : i32
    %c0_i32 = arith.constant 0 : i32
    %c0_i32_0 = arith.constant 0 : i32
    %c0_i32_1 = arith.constant 0 : i32
    return %arg0, %5, %c0_i32, %c0_i32_0 : i32, i32, i32, i32
  }
}

module attributes {stable_mosaic.version = 11 : i64} {
  func.func @_grouped_linear_kernel(%arg0: i32, %arg1: memref<1x16x32xf32, #tpu.memory_space<vmem>>, %arg2: memref<1x32x96xbf16, #tpu.memory_space<vmem>>, %arg3: memref<1x1x96xf32, #tpu.memory_space<vmem>>, %arg4: memref<1x16x96xf32, #tpu.memory_space<vmem>>) attributes {dimension_semantics = [#tpu.dimension_semantics<parallel>], iteration_bounds = array<i64: 4>, scalar_prefetch = 0 : i64, scratch_operands = 0 : i64, tpu.core_type = #tpu.core_type<tc>, window_params = [{pipeline_mode = #tpu.pipeline_mode<synchronous>, transform_indices = @transform_0, window_bounds = array<i64: 1, 16, 32>}, {transform_indices = @transform_1, window_bounds = array<i64: 1, 32, 96>}, {transform_indices = @transform_2, window_bounds = array<i64: 1, 1, 96>}, {transform_indices = @transform_3, window_bounds = array<i64: 1, 16, 96>}]} {
    %c0 = arith.constant 0 : index
    %c0_0 = arith.constant 0 : index
    %c0_1 = arith.constant 0 : index
    %0 = vector.load %arg1[%c0, %c0_0, %c0_1] : memref<1x16x32xf32, #tpu.memory_space<vmem>>, vector<1x16x32xf32>
    %1 = vector.shape_cast %0 : vector<1x16x32xf32> to vector<16x32xf32>
    %2 = arith.truncf %1 : vector<16x32xf32> to vector<16x32xbf16>
    %c0_2 = arith.constant 0 : index
    %c0_3 = arith.constant 0 : index
    %c0_4 = arith.constant 0 : index
    %3 = vector.load %arg2[%c0_2, %c0_3, %c0_4] : memref<1x32x96xbf16, #tpu.memory_space<vmem>>, vector<1x32x96xbf16>
    %4 = vector.shape_cast %3 : vector<1x32x96xbf16> to vector<32x96xbf16>
    %cst = arith.constant dense<0.000000e+00> : vector<16x96xf32>
    %5 = tpu.matmul %2, %4, %cst {dimension_numbers = #tpu.dot_dimension_numbers<[1], [0], [0], [1], [0, 0, 1, 1], [], []>} : vector<16x32xbf16>, vector<32x96xbf16>, vector<16x96xf32> -> vector<16x96xf32>
    %c0_5 = arith.constant 0 : index
    %c0_6 = arith.constant 0 : index
    %c0_7 = arith.constant 0 : index
    %6 = vector.load %arg3[%c0_5, %c0_6, %c0_7] : memref<1x1x96xf32, #tpu.memory_space<vmem>>, vector<1x1x96xf32>
    %7 = vector.shape_cast %6 : vector<1x1x96xf32> to vector<1x96xf32>
    %8 = vector.broadcast %7 : vector<1x96xf32> to vector<16x96xf32>
    %9 = arith.addf %5, %8 : vector<16x96xf32>
    %c0_8 = arith.constant 0 : index
    %c0_9 = arith.constant 0 : index
    %c0_10 = arith.constant 0 : index
    %10 = vector.load %arg4[%c0_8, %c0_9, %c0_10] : memref<1x16x96xf32, #tpu.memory_space<vmem>>, vector<1x16x96xf32>
    %11 = vector.shape_cast %10 : vector<1x16x96xf32> to vector<16x96xf32>
    %12 = vector.shape_cast %9 : vector<16x96xf32> to vector<1x16x96xf32>
    tpu.vector_store %arg4[%c0_8, %c0_9, %c0_10], %12 {strides = array<i32>} : memref<1x16x96xf32, #tpu.memory_space<vmem>>, vector<1x16x96xf32>,
    return
  }
  func.func @transform_0(%arg0: i32) -> (i32, i32, i32) {
    %c0_i32 = arith.constant 0 : i32
    %c0_i32_0 = arith.constant 0 : i32
    %c0_i32_1 = arith.constant 0 : i32
    %c0_i32_2 = arith.constant 0 : i32
    return %c0_i32, %c0_i32_0, %c0_i32_1 : i32, i32, i32
  }
  func.func @transform_1(%arg0: i32) -> (i32, i32, i32) {
    %c0_i32 = arith.constant 0 : i32
    %c0_i32_0 = arith.constant 0 : i32
    %c0_i32_1 = arith.constant 0 : i32
    return %arg0, %c0_i32, %c0_i32_0 : i32, i32, i32
  }
  func.func @transform_2(%arg0: i32) -> (i32, i32, i32) {
    %c0_i32 = arith.constant 0 : i32
    %c0_i32_0 = arith.constant 0 : i32
    %c0_i32_1 = arith.constant 0 : i32
    return %arg0, %c0_i32, %c0_i32_0 : i32, i32, i32
  }
  func.func @transform_3(%arg0: i32) -> (i32, i32, i32) {
    %c0_i32 = arith.constant 0 : i32
    %c0_i32_0 = arith.constant 0 : i32
    %c0_i32_1 = arith.constant 0 : i32
    return %arg0, %c0_i32, %c0_i32_0 : i32, i32, i32
  }
}

module attributes {stable_mosaic.version = 11 : i64} {
  func.func @_grouped_linear_kernel(%arg0: i32, %arg1: memref<1x2x64xf32, #tpu.memory_space<vmem>>, %arg2: memref<1x64x16xbf16, #tpu.memory_space<vmem>>, %arg3: memref<1x1x16xf32, #tpu.memory_space<vmem>>, %arg4: memref<1x2x16xf32, #tpu.memory_space<vmem>>) attributes {dimension_semantics = [#tpu.dimension_semantics<parallel>], iteration_bounds = array<i64: 2>, scalar_prefetch = 0 : i64, scratch_operands = 0 : i64, tpu.core_type = #tpu.core_type<tc>, window_params = [{transform_indices = @transform_0, window_bounds = array<i64: 1, 2, 64>}, {transform_indices = @transform_1, window_bounds = array<i64: 1, 64, 16>}, {transform_indices = @transform_2, window_bounds = array<i64: 1, 1, 16>}, {transform_indices = @transform_3, window_bounds = array<i64: 1, 2, 16>}]} {
    %c0 = arith.constant 0 : index
    %c0_0 = arith.constant 0 : index
    %c0_1 = arith.constant 0 : index
    %0 = vector.load %arg1[%c0, %c0_0, %c0_1] : memref<1x2x64xf32, #tpu.memory_space<vmem>>, vector<1x2x64xf32>
    %1 = vector.shape_cast %0 : vector<1x2x64xf32> to vector<2x64xf32>
    %2 = arith.truncf %1 : vector<2x64xf32> to vector<2x64xbf16>
    %c0_2 = arith.constant 0 : index
    %c0_3 = arith.constant 0 : index
    %c0_4 = arith.constant 0 : index
    %3 = vector.load %arg2[%c0_2, %c0_3, %c0_4] : memref<1x64x16xbf16, #tpu.memory_space<vmem>>, vector<1x64x16xbf16>
    %4 = vector.shape_cast %3 : vector<1x64x16xbf16> to vector<64x16xbf16>
    %cst = arith.constant dense<0.000000e+00> : vector<2x16xf32>
    %5 = tpu.matmul %2, %4, %cst {dimension_numbers = #tpu.dot_dimension_numbers<[1], [0], [0], [1], [0, 0, 1, 1], [], []>} : vector<2x64xbf16>, vector<64x16xbf16>, vector<2x16xf32> -> vector<2x16xf32>
    %c0_5 = arith.constant 0 : index
    %c0_6 = arith.constant 0 : index
    %c0_7 = arith.constant 0 : index
    %6 = vector.load %arg3[%c0_5, %c0_6, %c0_7] : memref<1x1x16xf32, #tpu.memory_space<vmem>>, vector<1x1x16xf32>
    %7 = vector.shape_cast %6 : vector<1x1x16xf32> to vector<1x16xf32>
    %8 = vector.broadcast %7 : vector<1x16xf32> to vector<2x16xf32>
    %9 = arith.addf %5, %8 : vector<2x16xf32>
    %c0_8 = arith.constant 0 : index
    %c0_9 = arith.constant 0 : index
    %c0_10 = arith.constant 0 : index
    %10 = vector.load %arg4[%c0_8, %c0_9, %c0_10] : memref<1x2x16xf32, #tpu.memory_space<vmem>>, vector<1x2x16xf32>
    %11 = vector.shape_cast %10 : vector<1x2x16xf32> to vector<2x16xf32>
    %12 = vector.shape_cast %9 : vector<2x16xf32> to vector<1x2x16xf32>
    tpu.vector_store %arg4[%c0_8, %c0_9, %c0_10], %12 {strides = array<i32>} : memref<1x2x16xf32, #tpu.memory_space<vmem>>, vector<1x2x16xf32>,
    return
  }
  func.func @transform_0(%arg0: i32) -> (i32, i32, i32) {
    %c0_i32 = arith.constant 0 : i32
    %c0_i32_0 = arith.constant 0 : i32
    %c0_i32_1 = arith.constant 0 : i32
    return %arg0, %c0_i32, %c0_i32_0 : i32, i32, i32
  }
  func.func @transform_1(%arg0: i32) -> (i32, i32, i32) {
    %c0_i32 = arith.constant 0 : i32
    %c0_i32_0 = arith.constant 0 : i32
    %c0_i32_1 = arith.constant 0 : i32
    return %arg0, %c0_i32, %c0_i32_0 : i32, i32, i32
  }
  func.func @transform_2(%arg0: i32) -> (i32, i32, i32) {
    %c0_i32 = arith.constant 0 : i32
    %c0_i32_0 = arith.constant 0 : i32
    %c0_i32_1 = arith.constant 0 : i32
    return %arg0, %c0_i32, %c0_i32_0 : i32, i32, i32
  }
  func.func @transform_3(%arg0: i32) -> (i32, i32, i32) {
    %c0_i32 = arith.constant 0 : i32
    %c0_i32_0 = arith.constant 0 : i32
    %c0_i32_1 = arith.constant 0 : i32
    return %arg0, %c0_i32, %c0_i32_0 : i32, i32, i32
  }
}

module attributes {stable_mosaic.version = 11 : i64} {
  func.func @_grouped_linear_kernel(%arg0: i32, %arg1: memref<1x2x16xf32, #tpu.memory_space<vmem>>, %arg2: memref<1x16x32xbf16, #tpu.memory_space<vmem>>, %arg3: memref<1x1x32xf32, #tpu.memory_space<vmem>>, %arg4: memref<1x2x32xf32, #tpu.memory_space<vmem>>) attributes {dimension_semantics = [#tpu.dimension_semantics<parallel>], iteration_bounds = array<i64: 2>, scalar_prefetch = 0 : i64, scratch_operands = 0 : i64, tpu.core_type = #tpu.core_type<tc>, window_params = [{transform_indices = @transform_0, window_bounds = array<i64: 1, 2, 16>}, {transform_indices = @transform_1, window_bounds = array<i64: 1, 16, 32>}, {transform_indices = @transform_2, window_bounds = array<i64: 1, 1, 32>}, {transform_indices = @transform_3, window_bounds = array<i64: 1, 2, 32>}]} {
    %c0 = arith.constant 0 : index
    %c0_0 = arith.constant 0 : index
    %c0_1 = arith.constant 0 : index
    %0 = vector.load %arg1[%c0, %c0_0, %c0_1] : memref<1x2x16xf32, #tpu.memory_space<vmem>>, vector<1x2x16xf32>
    %1 = vector.shape_cast %0 : vector<1x2x16xf32> to vector<2x16xf32>
    %2 = math.tanh %1 : vector<2x16xf32>
    %3 = arith.truncf %2 : vector<2x16xf32> to vector<2x16xbf16>
    %c0_2 = arith.constant 0 : index
    %c0_3 = arith.constant 0 : index
    %c0_4 = arith.constant 0 : index
    %4 = vector.load %arg2[%c0_2, %c0_3, %c0_4] : memref<1x16x32xbf16, #tpu.memory_space<vmem>>, vector<1x16x32xbf16>
    %5 = vector.shape_cast %4 : vector<1x16x32xbf16> to vector<16x32xbf16>
    %cst = arith.constant dense<0.000000e+00> : vector<2x32xf32>
    %6 = tpu.matmul %3, %5, %cst {dimension_numbers = #tpu.dot_dimension_numbers<[1], [0], [0], [1], [0, 0, 1, 1], [], []>} : vector<2x16xbf16>, vector<16x32xbf16>, vector<2x32xf32> -> vector<2x32xf32>
    %c0_5 = arith.constant 0 : index
    %c0_6 = arith.constant 0 : index
    %c0_7 = arith.constant 0 : index
    %7 = vector.load %arg3[%c0_5, %c0_6, %c0_7] : memref<1x1x32xf32, #tpu.memory_space<vmem>>, vector<1x1x32xf32>
    %8 = vector.shape_cast %7 : vector<1x1x32xf32> to vector<1x32xf32>
    %9 = vector.broadcast %8 : vector<1x32xf32> to vector<2x32xf32>
    %10 = arith.addf %6, %9 : vector<2x32xf32>
    %c0_8 = arith.constant 0 : index
    %c0_9 = arith.constant 0 : index
    %c0_10 = arith.constant 0 : index
    %11 = vector.load %arg4[%c0_8, %c0_9, %c0_10] : memref<1x2x32xf32, #tpu.memory_space<vmem>>, vector<1x2x32xf32>
    %12 = vector.shape_cast %11 : vector<1x2x32xf32> to vector<2x32xf32>
    %13 = vector.shape_cast %10 : vector<2x32xf32> to vector<1x2x32xf32>
    tpu.vector_store %arg4[%c0_8, %c0_9, %c0_10], %13 {strides = array<i32>} : memref<1x2x32xf32, #tpu.memory_space<vmem>>, vector<1x2x32xf32>,
    return
  }
  func.func @transform_0(%arg0: i32) -> (i32, i32, i32) {
    %c0_i32 = arith.constant 0 : i32
    %c0_i32_0 = arith.constant 0 : i32
    %c0_i32_1 = arith.constant 0 : i32
    return %arg0, %c0_i32, %c0_i32_0 : i32, i32, i32
  }
  func.func @transform_1(%arg0: i32) -> (i32, i32, i32) {
    %c0_i32 = arith.constant 0 : i32
    %c0_i32_0 = arith.constant 0 : i32
    %c0_i32_1 = arith.constant 0 : i32
    return %arg0, %c0_i32, %c0_i32_0 : i32, i32, i32
  }
  func.func @transform_2(%arg0: i32) -> (i32, i32, i32) {
    %c0_i32 = arith.constant 0 : i32
    %c0_i32_0 = arith.constant 0 : i32
    %c0_i32_1 = arith.constant 0 : i32
    return %arg0, %c0_i32, %c0_i32_0 : i32, i32, i32
  }
  func.func @transform_3(%arg0: i32) -> (i32, i32, i32) {
    %c0_i32 = arith.constant 0 : i32
    %c0_i32_0 = arith.constant 0 : i32
    %c0_i32_1 = arith.constant 0 : i32
    return %arg0, %c0_i32, %c0_i32_0 : i32, i32, i32
  }
}

module attributes {stable_mosaic.version = 11 : i64} {
  func.func @_grouped_linear_kernel(%arg0: i32, %arg1: memref<1x16x32xf32, #tpu.memory_space<vmem>>, %arg2: memref<1x32x96xbf16, #tpu.memory_space<vmem>>, %arg3: memref<1x1x96xf32, #tpu.memory_space<vmem>>, %arg4: memref<1x16x96xf32, #tpu.memory_space<vmem>>) attributes {dimension_semantics = [#tpu.dimension_semantics<parallel>], iteration_bounds = array<i64: 2>, scalar_prefetch = 0 : i64, scratch_operands = 0 : i64, tpu.core_type = #tpu.core_type<tc>, window_params = [{transform_indices = @transform_0, window_bounds = array<i64: 1, 16, 32>}, {transform_indices = @transform_1, window_bounds = array<i64: 1, 32, 96>}, {transform_indices = @transform_2, window_bounds = array<i64: 1, 1, 96>}, {transform_indices = @transform_3, window_bounds = array<i64: 1, 16, 96>}]} {
    %c0 = arith.constant 0 : index
    %c0_0 = arith.constant 0 : index
    %c0_1 = arith.constant 0 : index
    %0 = vector.load %arg1[%c0, %c0_0, %c0_1] : memref<1x16x32xf32, #tpu.memory_space<vmem>>, vector<1x16x32xf32>
    %1 = vector.shape_cast %0 : vector<1x16x32xf32> to vector<16x32xf32>
    %2 = arith.truncf %1 : vector<16x32xf32> to vector<16x32xbf16>
    %c0_2 = arith.constant 0 : index
    %c0_3 = arith.constant 0 : index
    %c0_4 = arith.constant 0 : index
    %3 = vector.load %arg2[%c0_2, %c0_3, %c0_4] : memref<1x32x96xbf16, #tpu.memory_space<vmem>>, vector<1x32x96xbf16>
    %4 = vector.shape_cast %3 : vector<1x32x96xbf16> to vector<32x96xbf16>
    %cst = arith.constant dense<0.000000e+00> : vector<16x96xf32>
    %5 = tpu.matmul %2, %4, %cst {dimension_numbers = #tpu.dot_dimension_numbers<[1], [0], [0], [1], [0, 0, 1, 1], [], []>} : vector<16x32xbf16>, vector<32x96xbf16>, vector<16x96xf32> -> vector<16x96xf32>
    %c0_5 = arith.constant 0 : index
    %c0_6 = arith.constant 0 : index
    %c0_7 = arith.constant 0 : index
    %6 = vector.load %arg3[%c0_5, %c0_6, %c0_7] : memref<1x1x96xf32, #tpu.memory_space<vmem>>, vector<1x1x96xf32>
    %7 = vector.shape_cast %6 : vector<1x1x96xf32> to vector<1x96xf32>
    %8 = vector.broadcast %7 : vector<1x96xf32> to vector<16x96xf32>
    %9 = arith.addf %5, %8 : vector<16x96xf32>
    %c0_8 = arith.constant 0 : index
    %c0_9 = arith.constant 0 : index
    %c0_10 = arith.constant 0 : index
    %10 = vector.load %arg4[%c0_8, %c0_9, %c0_10] : memref<1x16x96xf32, #tpu.memory_space<vmem>>, vector<1x16x96xf32>
    %11 = vector.shape_cast %10 : vector<1x16x96xf32> to vector<16x96xf32>
    %12 = vector.shape_cast %9 : vector<16x96xf32> to vector<1x16x96xf32>
    tpu.vector_store %arg4[%c0_8, %c0_9, %c0_10], %12 {strides = array<i32>} : memref<1x16x96xf32, #tpu.memory_space<vmem>>, vector<1x16x96xf32>,
    return
  }
  func.func @transform_0(%arg0: i32) -> (i32, i32, i32) {
    %c0_i32 = arith.constant 0 : i32
    %c0_i32_0 = arith.constant 0 : i32
    %c0_i32_1 = arith.constant 0 : i32
    return %arg0, %c0_i32, %c0_i32_0 : i32, i32, i32
  }
  func.func @transform_1(%arg0: i32) -> (i32, i32, i32) {
    %c0_i32 = arith.constant 0 : i32
    %c0_i32_0 = arith.constant 0 : i32
    %c0_i32_1 = arith.constant 0 : i32
    return %arg0, %c0_i32, %c0_i32_0 : i32, i32, i32
  }
  func.func @transform_2(%arg0: i32) -> (i32, i32, i32) {
    %c0_i32 = arith.constant 0 : i32
    %c0_i32_0 = arith.constant 0 : i32
    %c0_i32_1 = arith.constant 0 : i32
    return %arg0, %c0_i32, %c0_i32_0 : i32, i32, i32
  }
  func.func @transform_3(%arg0: i32) -> (i32, i32, i32) {
    %c0_i32 = arith.constant 0 : i32
    %c0_i32_0 = arith.constant 0 : i32
    %c0_i32_1 = arith.constant 0 : i32
    return %arg0, %c0_i32, %c0_i32_0 : i32, i32, i32
  }
}

module attributes {stable_mosaic.version = 11 : i64} {
  func.func @_linear_vtile_kernel(%arg0: i32, %arg1: memref<32x32xf32, #tpu.memory_space<vmem>>, %arg2: memref<32x128xbf16, #tpu.memory_space<vmem>>, %arg3: memref<1x128xf32, #tpu.memory_space<vmem>>, %arg4: memref<32x128xf32, #tpu.memory_space<vmem>>) attributes {dimension_semantics = [#tpu.dimension_semantics<parallel>], iteration_bounds = array<i64: 1>, scalar_prefetch = 0 : i64, scratch_operands = 0 : i64, tpu.core_type = #tpu.core_type<tc>, window_params = [{pipeline_mode = #tpu.pipeline_mode<synchronous>, transform_indices = @transform_0, window_bounds = array<i64: 32, 32>}, {transform_indices = @transform_1, window_bounds = array<i64: 32, 128>}, {transform_indices = @transform_2, window_bounds = array<i64: 1, 128>}, {transform_indices = @transform_3, window_bounds = array<i64: 32, 128>}]} {
    %c0 = arith.constant 0 : index
    %c0_0 = arith.constant 0 : index
    %0 = vector.load %arg1[%c0, %c0_0] : memref<32x32xf32, #tpu.memory_space<vmem>>, vector<32x32xf32>
    %1 = arith.truncf %0 : vector<32x32xf32> to vector<32x32xbf16>
    %c0_1 = arith.constant 0 : index
    %c0_2 = arith.constant 0 : index
    %2 = vector.load %arg2[%c0_1, %c0_2] : memref<32x128xbf16, #tpu.memory_space<vmem>>, vector<32x128xbf16>
    %cst = arith.constant dense<0.000000e+00> : vector<32x128xf32>
    %3 = tpu.matmul %1, %2, %cst {dimension_numbers = #tpu.dot_dimension_numbers<[1], [0], [0], [1], [0, 0, 1, 1], [], []>} : vector<32x32xbf16>, vector<32x128xbf16>, vector<32x128xf32> -> vector<32x128xf32>
    %c0_3 = arith.constant 0 : index
    %c0_4 = arith.constant 0 : index
    %4 = vector.load %arg3[%c0_3, %c0_4] : memref<1x128xf32, #tpu.memory_space<vmem>>, vector<1x128xf32>
    %5 = vector.broadcast %4 : vector<1x128xf32> to vector<32x128xf32>
    %6 = arith.addf %3, %5 : vector<32x128xf32>
    %c0_5 = arith.constant 0 : index
    %c0_6 = arith.constant 0 : index
    %7 = vector.load %arg4[%c0_5, %c0_6] : memref<32x128xf32, #tpu.memory_space<vmem>>, vector<32x128xf32>
    tpu.vector_store %arg4[%c0_5, %c0_6], %6 {strides = array<i32>} : memref<32x128xf32, #tpu.memory_space<vmem>>, vector<32x128xf32>,
    return
  }
  func.func @transform_0(%arg0: i32) -> (i32, i32) {
    %c0_i32 = arith.constant 0 : i32
    %c0_i32_0 = arith.constant 0 : i32
    %c0_i32_1 = arith.constant 0 : i32
    return %c0_i32, %c0_i32_0 : i32, i32
  }
  func.func @transform_1(%arg0: i32) -> (i32, i32) {
    %c0_i32 = arith.constant 0 : i32
    %c0_i32_0 = arith.constant 0 : i32
    return %c0_i32, %arg0 : i32, i32
  }
  func.func @transform_2(%arg0: i32) -> (i32, i32) {
    %c0_i32 = arith.constant 0 : i32
    %c0_i32_0 = arith.constant 0 : i32
    return %c0_i32, %arg0 : i32, i32
  }
  func.func @transform_3(%arg0: i32) -> (i32, i32) {
    %c0_i32 = arith.constant 0 : i32
    %c0_i32_0 = arith.constant 0 : i32
    return %c0_i32, %arg0 : i32, i32
  }
}

module attributes {stable_mosaic.version = 11 : i64} {
  func.func @_gru_step_kernel(%arg0: i32, %arg1: i32, %arg2: memref<2xi32, #tpu.memory_space<smem>>, %arg3: memref<1x1x8x96xf32, #tpu.memory_space<vmem>>, %arg4: memref<1x32x96xbf16, #tpu.memory_space<vmem>>, %arg5: memref<1x1x32xf32, #tpu.memory_space<vmem>>, %arg6: memref<1x1x8x32xf32, #tpu.memory_space<vmem>>, %arg7: memref<8x32xf32, #tpu.memory_space<vmem>>) attributes {dimension_semantics = [#tpu.dimension_semantics<parallel>, #tpu.dimension_semantics<arbitrary>], iteration_bounds = array<i64: 2, 2>, scalar_prefetch = 1 : i64, scratch_operands = 1 : i64, tpu.core_type = #tpu.core_type<tc>, window_params = [{transform_indices = @transform_0, window_bounds = array<i64: 1, 1, 8, 96>}, {transform_indices = @transform_1, window_bounds = array<i64: 1, 32, 96>}, {transform_indices = @transform_2, window_bounds = array<i64: 1, 1, 32>}, {transform_indices = @transform_3, window_bounds = array<i64: 1, 1, 8, 32>}]} {
    %c0_i32 = arith.constant 0 : i32
    %0 = arith.cmpi eq, %arg1, %c0_i32 : i32
    %1 = arith.extui %0 : i1 to i32
    %c0_i32_0 = arith.constant 0 : i32
    %2 = arith.cmpi ne, %1, %c0_i32_0 : i32
    scf.if %2 {
      %cst_21 = arith.constant 0.000000e+00 : f32
      %44 = vector.broadcast %cst_21 : f32 to vector<8x32xf32>
      %c0_22 = arith.constant 0 : index
      %c0_23 = arith.constant 0 : index
      %45 = vector.load %arg7[%c0_22, %c0_23] : memref<8x32xf32, #tpu.memory_space<vmem>>, vector<8x32xf32>
      tpu.vector_store %arg7[%c0_22, %c0_23], %44 {strides = array<i32>} : memref<8x32xf32, #tpu.memory_space<vmem>>, vector<8x32xf32>,
    } else {
    }
    %c0 = arith.constant 0 : index
    %c0_1 = arith.constant 0 : index
    %3 = vector.load %arg7[%c0, %c0_1] : memref<8x32xf32, #tpu.memory_space<vmem>>, vector<8x32xf32>
    %c0_2 = arith.constant 0 : index
    %c0_3 = arith.constant 0 : index
    %c0_4 = arith.constant 0 : index
    %c0_5 = arith.constant 0 : index
    %4 = vector.load %arg3[%c0_2, %c0_3, %c0_4, %c0_5] : memref<1x1x8x96xf32, #tpu.memory_space<vmem>>, vector<1x1x8x96xf32>
    %5 = vector.shape_cast %4 : vector<1x1x8x96xf32> to vector<8x96xf32>
    %6 = arith.truncf %3 : vector<8x32xf32> to vector<8x32xbf16>
    %c0_6 = arith.constant 0 : index
    %c0_7 = arith.constant 0 : index
    %c0_8 = arith.constant 0 : index
    %7 = vector.load %arg4[%c0_6, %c0_7, %c0_8] : memref<1x32x96xbf16, #tpu.memory_space<vmem>>, vector<1x32x96xbf16>
    %8 = vector.shape_cast %7 : vector<1x32x96xbf16> to vector<32x96xbf16>
    %cst = arith.constant dense<0.000000e+00> : vector<8x96xf32>
    %9 = tpu.matmul %6, %8, %cst {dimension_numbers = #tpu.dot_dimension_numbers<[1], [0], [0], [1], [0, 0, 1, 1], [], []>} : vector<8x32xbf16>, vector<32x96xbf16>, vector<8x96xf32> -> vector<8x96xf32>
    %10 = vector.extract_strided_slice %5 {offsets = [0, 0], sizes = [8, 32], strides = [1, 1]} : vector<8x96xf32> to vector<8x32xf32>
    %11 = vector.extract_strided_slice %9 {offsets = [0, 0], sizes = [8, 32], strides = [1, 1]} : vector<8x96xf32> to vector<8x32xf32>
    %12 = arith.addf %10, %11 : vector<8x32xf32>
    %13 = arith.negf %12 : vector<8x32xf32>
    %14 = math.exp %13 : vector<8x32xf32>
    %cst_9 = arith.constant 1.000000e+00 : f32
    %15 = vector.broadcast %cst_9 : f32 to vector<8x32xf32>
    %16 = arith.addf %15, %14 : vector<8x32xf32>
    %17 = arith.divf %15, %16 : vector<8x32xf32>
    %18 = vector.extract_strided_slice %5 {offsets = [0, 32], sizes = [8, 32], strides = [1, 1]} : vector<8x96xf32> to vector<8x32xf32>
    %19 = vector.extract_strided_slice %9 {offsets = [0, 32], sizes = [8, 32], strides = [1, 1]} : vector<8x96xf32> to vector<8x32xf32>
    %20 = arith.addf %18, %19 : vector<8x32xf32>
    %21 = arith.negf %20 : vector<8x32xf32>
    %22 = math.exp %21 : vector<8x32xf32>
    %cst_10 = arith.constant 1.000000e+00 : f32
    %23 = vector.broadcast %cst_10 : f32 to vector<8x32xf32>
    %24 = arith.addf %23, %22 : vector<8x32xf32>
    %25 = arith.divf %23, %24 : vector<8x32xf32>
    %26 = vector.extract_strided_slice %5 {offsets = [0, 64], sizes = [8, 32], strides = [1, 1]} : vector<8x96xf32> to vector<8x32xf32>
    %27 = vector.extract_strided_slice %9 {offsets = [0, 64], sizes = [8, 32], strides = [1, 1]} : vector<8x96xf32> to vector<8x32xf32>
    %c0_11 = arith.constant 0 : index
    %c0_12 = arith.constant 0 : index
    %c0_13 = arith.constant 0 : index
    %28 = vector.load %arg5[%c0_11, %c0_12, %c0_13] : memref<1x1x32xf32, #tpu.memory_space<vmem>>, vector<1x1x32xf32>
    %29 = vector.shape_cast %28 : vector<1x1x32xf32> to vector<1x32xf32>
    %30 = vector.broadcast %29 : vector<1x32xf32> to vector<8x32xf32>
    %31 = arith.addf %27, %30 : vector<8x32xf32>
    %32 = arith.mulf %17, %31 : vector<8x32xf32>
    %33 = arith.addf %26, %32 : vector<8x32xf32>
    %34 = math.tanh %33 : vector<8x32xf32>
    %cst_14 = arith.constant 1.000000e+00 : f32
    %35 = vector.broadcast %cst_14 : f32 to vector<8x32xf32>
    %36 = arith.subf %35, %25 : vector<8x32xf32>
    %37 = arith.mulf %36, %34 : vector<8x32xf32>
    %38 = arith.mulf %25, %3 : vector<8x32xf32>
    %39 = arith.addf %37, %38 : vector<8x32xf32>
    %c0_15 = arith.constant 0 : index
    %c0_16 = arith.constant 0 : index
    %40 = vector.load %arg7[%c0_15, %c0_16] : memref<8x32xf32, #tpu.memory_space<vmem>>, vector<8x32xf32>
    tpu.vector_store %arg7[%c0_15, %c0_16], %39 {strides = array<i32>} : memref<8x32xf32, #tpu.memory_space<vmem>>, vector<8x32xf32>,
    %c0_17 = arith.constant 0 : index
    %c0_18 = arith.constant 0 : index
    %c0_19 = arith.constant 0 : index
    %c0_20 = arith.constant 0 : index
    %41 = vector.load %arg6[%c0_17, %c0_18, %c0_19, %c0_20] : memref<1x1x8x32xf32, #tpu.memory_space<vmem>>, vector<1x1x8x32xf32>
    %42 = vector.shape_cast %41 : vector<1x1x8x32xf32> to vector<8x32xf32>
    %43 = vector.shape_cast %39 : vector<8x32xf32> to vector<1x1x8x32xf32>
    tpu.vector_store %arg6[%c0_17, %c0_18, %c0_19, %c0_20], %43 {strides = array<i32>} : memref<1x1x8x32xf32, #tpu.memory_space<vmem>>, vector<1x1x8x32xf32>,
    return
  }
  func.func @transform_0(%arg0: i32, %arg1: i32, %arg2: memref<2xi32, #tpu.memory_space<smem>>) -> (i32, i32, i32, i32) {
    %0 = arith.index_cast %arg0 : i32 to index
    %1 = memref.load %arg2[%0] : memref<2xi32, #tpu.memory_space<smem>>
    %c2_i32 = arith.constant 2 : i32
    %2 = arith.muli %c2_i32, %arg1 : i32
    %c1_i32 = arith.constant 1 : i32
    %3 = arith.subi %c1_i32, %2 : i32
    %4 = arith.muli %1, %3 : i32
    %5 = arith.addi %arg1, %4 : i32
    %c0_i32 = arith.constant 0 : i32
    %c0_i32_0 = arith.constant 0 : i32
    %c0_i32_1 = arith.constant 0 : i32
    return %arg0, %5, %c0_i32, %c0_i32_0 : i32, i32, i32, i32
  }
  func.func @transform_1(%arg0: i32, %arg1: i32, %arg2: memref<2xi32, #tpu.memory_space<smem>>) -> (i32, i32, i32) {
    %c0_i32 = arith.constant 0 : i32
    %c0_i32_0 = arith.constant 0 : i32
    %c0_i32_1 = arith.constant 0 : i32
    return %arg0, %c0_i32, %c0_i32_0 : i32, i32, i32
  }
  func.func @transform_2(%arg0: i32, %arg1: i32, %arg2: memref<2xi32, #tpu.memory_space<smem>>) -> (i32, i32, i32) {
    %c0_i32 = arith.constant 0 : i32
    %c0_i32_0 = arith.constant 0 : i32
    %c0_i32_1 = arith.constant 0 : i32
    return %arg0, %c0_i32, %c0_i32_0 : i32, i32, i32
  }
  func.func @transform_3(%arg0: i32, %arg1: i32, %arg2: memref<2xi32, #tpu.memory_space<smem>>) -> (i32, i32, i32, i32) {
    %0 = arith.index_cast %arg0 : i32 to index
    %1 = memref.load %arg2[%0] : memref<2xi32, #tpu.memory_space<smem>>
    %c2_i32 = arith.constant 2 : i32
    %2 = arith.muli %c2_i32, %arg1 : i32
    %c1_i32 = arith.constant 1 : i32
    %3 = arith.subi %c1_i32, %2 : i32
    %4 = arith.muli %1, %3 : i32
    %5 = arith.addi %arg1, %4 : i32
    %c0_i32 = arith.constant 0 : i32
    %c0_i32_0 = arith.constant 0 : i32
    %c0_i32_1 = arith.constant 0 : i32
    return %arg0, %5, %c0_i32, %c0_i32_0 : i32, i32, i32, i32
  }
}

</mosaic_0001>

<llo_original>
// kernel: enc_network_forward.7
$region0: #{enc_network_forward.7}
  #allocation0 [shape = 'u32[]', space=smem, size = 0x4, offset = 0x4, fixed_abs, tag = 'smem constant byte address 0x4 - core index']
  #allocation1 [shape = 'u32[144,128]{1,0:T(1,128)}', space=vmem, size = 0x12000, scoped, tag = 'internal scratch']
  %s0 = inlined_call_operand.vmem [shape: f32[1,16,32], index: 0, kind: input, shape index: {}]
  %s1 = inlined_call_operand.vmem [shape: bf16[4,32,96], index: 1, kind: input, shape index: {}]
  %s2 = inlined_call_operand.vmem [shape: f32[4,1,96], index: 2, kind: input, shape index: {}]
  %s3 = inlined_call_operand.vmem [shape: f32[4,16,96], index: 3, kind: output, shape index: {}]
  %s4 = sld [smem:[#allocation0]]
  $region45: #{enc_network_forward.7} parent=0
    _
  %s6 = ssub.s32 1, %s4
  %s7 = scalar_select 0, %s6, %s4
  loop: start=0, step=1, limit=6
  $region2: #{enc_network_forward.7} parent=0 // loop_pre_header
    _
  $region3: #{enc_network_forward.7} parent=0 // loop_header
    %s9 = sphi 0, %s13
    %p10 = scmp.ge.s32.totalorder %s9, 6
    %s17 = sphi 0, %s17
    %s19 = sphi 0, %s17
    %s20 = sphi 0, %s19
    %s34 = sphi 0, %s20
    %s40 = sphi 0, %s42
    %s43 = sphi 0, %s40
    %s44 = sphi 0, %s43
    %s60 = sphi 0, %s44
    %s66 = sphi 0, %s68
    %s69 = sphi 0, %s66
    %s70 = sphi 0, %s69
    %s86 = sphi 0, %s70
    %s92 = sphi 0, %s94
    %s95 = sphi 0, %s92
    %s96 = sphi 0, %s95
    %s112 = sphi 0, %s96
  $region4: #{enc_network_forward.7} parent=0 // loop_header_branch
    %12 = sbr.rel (%p10) target = $region8
  $region5: #{enc_network_forward.7} parent=0 // loop_body
    %s14 = ssub.s32 %s9, 1
    %s15 = ssub.s32 %s9, 2
    %s16 = sadd.s32 %s9, 1
    %s18 = sadd.s32 %s17, 1
    %p21 = scmp.eq.s32.totalorder %s9, 3
    %p22 = scmp.ne.s32.totalorder %s17, %s19
    %p23 = scmp.eq.s32.totalorder %s9, 0
    %p24 = por %p22, %p23
    %p25 = scmp.ne.s32.totalorder %s17, %s19
    %p26 = scmp.eq.s32.totalorder %s14, 3
    %p27 = por %p25, %p26
    %p28 = scmp.ne.s32.totalorder %s19, %s20
    %p29 = scmp.eq.s32.totalorder %s14, 0
    %p30 = por %p28, %p29
    %p31 = scmp.ne.s32.totalorder %s19, %s20
    %p32 = scmp.eq.s32.totalorder %s15, 3
    %p33 = por %p31, %p32
    %p35 = scmp.ne.s32.totalorder %s20, %s34
    %p36 = scmp.eq.s32.totalorder %s15, 0
    %p37 = por %p35, %p36
    %s38 = ssub.s32 %s9, %s16
    %p39 = scmp.eq.s32.totalorder %s38, 0
    %s41 = sadd.s32 %s40, 1
    %s42 = scalar_select %p39, %s40, %s41
    %p45 = pneg %p39
    %p46 = scmp.eq.s32.totalorder %s9, 3
    %p47 = por %p45, %p46
    %p48 = scmp.ne.s32.totalorder %s40, %s43
    %p49 = scmp.eq.s32.totalorder %s9, 0
    %p50 = por %p48, %p49
    %p51 = scmp.ne.s32.totalorder %s40, %s43
    %p52 = scmp.eq.s32.totalorder %s14, 3
    %p53 = por %p51, %p52
    %p54 = scmp.ne.s32.totalorder %s43, %s44
    %p55 = scmp.eq.s32.totalorder %s14, 0
    %p56 = por %p54, %p55
    %p57 = scmp.ne.s32.totalorder %s43, %s44
    %p58 = scmp.eq.s32.totalorder %s15, 3
    %p59 = por %p57, %p58
    %p61 = scmp.ne.s32.totalorder %s44, %s60
    %p62 = scmp.eq.s32.totalorder %s15, 0
    %p63 = por %p61, %p62
    %s64 = ssub.s32 %s9, %s16
    %p65 = scmp.eq.s32.totalorder %s64, 0
    %s67 = sadd.s32 %s66, 1
    %s68 = scalar_select %p65, %s66, %s67
    %p71 = pneg %p65
    %p72 = scmp.eq.s32.totalorder %s9, 3
    %p73 = por %p71, %p72
    %p74 = scmp.ne.s32.totalorder %s66, %s69
    %p75 = scmp.eq.s32.totalorder %s9, 0
    %p76 = por %p74, %p75
    %p77 = scmp.ne.s32.totalorder %s66, %s69
    %p78 = scmp.eq.s32.totalorder %s14, 3
    %p79 = por %p77, %p78
    %p80 = scmp.ne.s32.totalorder %s69, %s70
    %p81 = scmp.eq.s32.totalorder %s14, 0
    %p82 = por %p80, %p81
    %p83 = scmp.ne.s32.totalorder %s69, %s70
    %p84 = scmp.eq.s32.totalorder %s15, 3
    %p85 = por %p83, %p84
    %p87 = scmp.ne.s32.totalorder %s70, %s86
    %p88 = scmp.eq.s32.totalorder %s15, 0
    %p89 = por %p87, %p88
    %s90 = ssub.s32 %s9, %s16
    %p91 = scmp.eq.s32.totalorder %s90, 0
    %s93 = sadd.s32 %s92, 1
    %s94 = scalar_select %p91, %s92, %s93
    %p97 = pneg %p91
    %p98 = scmp.eq.s32.totalorder %s9, 3
    %p99 = por %p97, %p98
    %p100 = scmp.ne.s32.totalorder %s92, %s95
    %p101 = scmp.eq.s32.totalorder %s9, 0
    %p102 = por %p100, %p101
    %p103 = scmp.ne.s32.totalorder %s92, %s95
    %p104 = scmp.eq.s32.totalorder %s14, 3
    %p105 = por %p103, %p104
    %p106 = scmp.ne.s32.totalorder %s95, %s96
    %p107 = scmp.eq.s32.totalorder %s14, 0
    %p108 = por %p106, %p107
    %p109 = scmp.ne.s32.totalorder %s95, %s96
    %p110 = scmp.eq.s32.totalorder %s15, 3
    %p111 = por %p109, %p110
    %p113 = scmp.ne.s32.totalorder %s96, %s112
    %p114 = scmp.eq.s32.totalorder %s15, 0
    %p115 = por %p113, %p114
    %p116 = scmp.le.s32.totalorder 1, %s9
    %p117 = scmp.lt.s32.totalorder %s9, 5
    %p118 = pnand %p116, %p117
    %p119 = pneg %p118
    // Predicated region
    $region9: #{enc_network_forward.7} parent=5 // pred_check
      _
    $region10: #{enc_network_forward.7} parent=5 // pred_check_branch
      %121 = sbr.rel (%p118) target = $region12
    $region11: #{enc_network_forward.7} parent=5 // pred_region
      %s122 = ssub.s32 %s9, 1
      // Predicated region
      $region13: #{enc_network_forward.7} parent=11 // pred_check
        %p123 = pneg %p30
      $region14: #{enc_network_forward.7} parent=11 // pred_check_branch
        %125 = sbr.rel (%p123) target = $region16
      $region15: #{enc_network_forward.7} parent=11 // pred_region
        _
      $region16: #{enc_network_forward.7} parent=11 // pred_fallthru
        _
    $region12: #{enc_network_forward.7} parent=5 // pred_fallthru
      _
    %p126 = scmp.lt.s32.totalorder %s9, 4
    // Predicated region
    $region17: #{enc_network_forward.7} parent=5 // pred_check
      %p127 = pneg %p126
    $region18: #{enc_network_forward.7} parent=5 // pred_check_branch
      %129 = sbr.rel (%p127) target = $region20
    $region19: #{enc_network_forward.7} parent=5 // pred_region
      // Predicated region
      $region21: #{enc_network_forward.7} parent=19 // pred_check
        %p130 = pneg %p50
      $region22: #{enc_network_forward.7} parent=19 // pred_check_branch
        %132 = sbr.rel (%p130) target = $region24
      $region23: #{enc_network_forward.7} parent=19 // pred_region
        %p133 = scmp.lt.s32.totalorder %s9, 3
        %s134 = scalar_select %p133, %s9, 3
        %s135 = smul.addr %s134, 4
        %s136 = smul.addr %s135, 4
        %s137 = scalar_lea.vmem %s1, %s136
      $region24: #{enc_network_forward.7} parent=19 // pred_fallthru
        _
      // Predicated region
      $region25: #{enc_network_forward.7} parent=19 // pred_check
        %p138 = pneg %p76
      $region26: #{enc_network_forward.7} parent=19 // pred_check_branch
        %140 = sbr.rel (%p138) target = $region28
      $region27: #{enc_network_forward.7} parent=19 // pred_region
        %p141 = scmp.lt.s32.totalorder %s9, 3
        %s142 = scalar_select %p141, %s9, 3
        %s143 = scalar_lea.vmem %s2, %s142
      $region28: #{enc_network_forward.7} parent=19 // pred_fallthru
        _
    $region20: #{enc_network_forward.7} parent=5 // pred_fallthru
      _
    %p144 = scmp.le.s32.totalorder 1, %s9
    %p145 = scmp.lt.s32.totalorder %s9, 5
    %p146 = pnand %p144, %p145
    %p147 = pneg %p146
    // Predicated region
    $region29: #{enc_network_forward.7} parent=5 // pred_check
      _
    $region30: #{enc_network_forward.7} parent=5 // pred_check_branch
      %149 = sbr.rel (%p146) target = $region32
    $region31: #{enc_network_forward.7} parent=5 // pred_region
      %s150 = ssub.s32 %s9, 1
      %p151 = pneg %p30
      %p152 = pneg %p27
      %p153 = scmp.lt.s32.totalorder %s14, 3
      %s154 = scalar_select %p153, %s14, 3
      %s155 = smul.addr %s154, 4
      %s156 = smul.addr %s155, 4
      %s157 = scalar_lea.vmem %s1, %s156
      %p158 = pneg %p56
      %p159 = pneg %p53
      %p160 = scmp.lt.s32.totalorder %s14, 3
      %s161 = scalar_select %p160, %s14, 3
      %s162 = scalar_lea.vmem %s2, %s161
      %p163 = pneg %p82
      %p164 = pneg %p79
      %p165 = pneg %p108
      %p166 = pneg %p105
      %p167 = scmp.lt.s32.totalorder %s14, 3
      %s168 = scalar_select %p167, %s14, 3
      %s169 = smul.addr %s168, 2
      %s170 = smul.addr %s169, 8
      %s171 = scalar_lea.vmem %s3, %s170
      %p172 = scmp.lt.s32.totalorder %s14, 3
      %s173 = scalar_select %p172, %s14, 3
      %s174 = smul.addr %s173, 4
      %s175 = smul.addr %s174, 4
      %s176 = scalar_lea.vmem %s1, %s175
      %p177 = scmp.lt.s32.totalorder %s14, 3
      %s178 = scalar_select %p177, %s14, 3
      %s179 = scalar_lea.vmem %s2, %s178
      %p180 = scmp.lt.s32.totalorder %s14, 3
      %s181 = scalar_select %p180, %s14, 3
      %s182 = smul.addr %s181, 2
      %s183 = smul.addr %s182, 8
      %s184 = scalar_lea.vmem %s3, %s183
      %v186 = vld [vmem:[%s0] sm:$0xff]
      %v187 = vld [vmem:[%s0 + $0x8] sm:$0xff]
      %v188 = vpack.c.bf16 %v187, %v186
      %v189 = vld [vmem:[%s176] sm:$0xf]
      %v190 = vld [vmem:[%s176 + $0x4] sm:$0xf]
      %v191 = vld [vmem:[%s176 + $0x8] sm:$0xf]
      %v192 = vld [vmem:[%s176 + $0xc] sm:$0xf]
      %v193 = vld [vmem:[%s179] sm:$0x1]
      %v195 = vlaneseq
      %v196 = vshrl.u32 %v195, 7
      %v197 = vsub.s32 0, %v196
      %v198 = vrot.slane %v193, %v197
      %v204 = vunpack.c.l.b16 %v189
      %v205 = vunpack.c.l.b16 %v190
      %v206 = vunpack.c.l.b16 %v191
      %v207 = vunpack.c.l.b16 %v192
      %v208 = vpack.c.b16 %v205, %v204
      %v209 = vpack.c.b16 %v207, %v206
      %vm212 = vcmask 261120
      %v214 = vsel %vm212, %v188, 0
      %216 = vmatprep.subr.bf16.mxu0 0
      %217 = vmatpush1.bf16.msra.mxu0 0
      %218 = vmatprep.subr.bf16.mxu0 0
      %219 = vmatpush1.bf16.msra.mxu0 0
      %220 = vmatprep.subr.bf16.mxu0 0
      %221 = vmatpush1.bf16.msra.mxu0 0
      %222 = vmatprep.subr.bf16.mxu0 0
      %223 = vmatpush1.bf16.msra.mxu0 0
      %224 = vmatprep.subr.bf16.mxu0 0
      %225 = vmatpush1.bf16.msra.mxu0 0
      %226 = vmatprep.subr.bf16.mxu0 0
      %227 = vmatpush1.bf16.msra.mxu0 0
      %228 = vmatprep.subr.bf16.mxu0 0
      %229 = vmatpush1.bf16.msra.mxu0 %v209
      %230 = vmatprep.subr.bf16.mxu0 0
      %231 = vmatpush1.bf16.msra.mxu0 %v208
      %232 = vmatprep.subr.bf16.mxu0 0
      %233 = vmatpush2.bf16.msra.mxu0 0
      %234 = vmatprep.subr.bf16.mxu0 0
      %235 = vmatpush2.bf16.msra.mxu0 0
      %236 = vmatprep.subr.bf16.mxu0 0
      %237 = vmatpush2.bf16.msra.mxu0 0
      %238 = vmatprep.subr.bf16.mxu0 0
      %239 = vmatpush2.bf16.msra.mxu0 0
      %240 = vmatprep.subr.bf16.mxu0 0
      %241 = vmatpush2.bf16.msra.mxu0 0
      %242 = vmatprep.subr.bf16.mxu0 0
      %243 = vmatpush2.bf16.msra.mxu0 0
      %244 = vmatprep.subr.bf16.mxu0 0
      %245 = vmatpush2.bf16.msra.mxu0 0
      %246 = vmatprep.subr.bf16.mxu0 0
      %247 = vmatpush2.bf16.msra.mxu0 0
      %248 = vmatprep.mubr.bf16.mxu0 0
      %249 = vmatmul.mubr.bf16.gmra.mxu0 %v214
      %v250 = vpop.f32.mrf.mxu0
      %v251 = vadd.f32 %v198, %v250
      %v252 = vpop.f32.mrf.mxu0
      %v253 = vpop.f32.mrf.mxu0
      %v254 = vadd.f32 %v198, %v253
      %v255 = vpop.f32.mrf.mxu0
      %256 = vdwg.mxu0
      %vm257 = vcmask 785408
      %258 = vst.msk [vmem:[%s184] sm:$0xff] %vm257, %v251
      %259 = vst.msk [vmem:[%s184 + $0x8] sm:$0xff] %vm257, %v254
      %p260 = scmp.lt.s32.totalorder %s14, 3
      %s261 = scalar_select %p260, %s14, 3
      %s262 = smul.addr %s261, 2
      %s263 = smul.addr %s262, 8
      %s264 = scalar_lea.vmem %s3, %s263
      // Predicated region
      $region33: #{enc_network_forward.7} parent=31 // pred_check
        %p265 = pneg %p105
      $region34: #{enc_network_forward.7} parent=31 // pred_check_branch
        %267 = sbr.rel (%p265) target = $region36
      $region35: #{enc_network_forward.7} parent=31 // pred_region
        _
      $region36: #{enc_network_forward.7} parent=31 // pred_fallthru
        _
    $region32: #{enc_network_forward.7} parent=5 // pred_fallthru
      _
    %p268 = scmp.le.s32.totalorder 2, %s9
    // Predicated region
    $region37: #{enc_network_forward.7} parent=5 // pred_check
      %p269 = pneg %p268
    $region38: #{enc_network_forward.7} parent=5 // pred_check_branch
      %271 = sbr.rel (%p269) target = $region40
    $region39: #{enc_network_forward.7} parent=5 // pred_region
      %s272 = ssub.s32 %s9, 2
      // Predicated region
      $region41: #{enc_network_forward.7} parent=39 // pred_check
        %p273 = pneg %p111
      $region42: #{enc_network_forward.7} parent=39 // pred_check_branch
        %275 = sbr.rel (%p273) target = $region44
      $region43: #{enc_network_forward.7} parent=39 // pred_region
        %p276 = scmp.lt.s32.totalorder %s15, 3
        %s277 = scalar_select %p276, %s15, 3
        %s278 = smul.addr %s277, 2
        %s279 = smul.addr %s278, 8
        %s280 = scalar_lea.vmem %s3, %s279
      $region44: #{enc_network_forward.7} parent=39 // pred_fallthru
        _
    $region40: #{enc_network_forward.7} parent=5 // pred_fallthru
      _
  $region6: #{enc_network_forward.7} parent=0 // loop_footer
    %s13 = sadd.s32 1, %s9
  $region7: #{enc_network_forward.7} parent=0 // loop_footer_branch
    %8 = sbr.rel target = $region3
  $region8: #{enc_network_forward.7} parent=0 // loop_exit
    _

// kernel: enc_network_forward.9
$region0: #{enc_network_forward.9}
  #allocation0 [shape = 'u32[]', space=smem, size = 0x4, offset = 0x4, fixed_abs, tag = 'smem constant byte address 0x4 - core index']
  #allocation1 [shape = 'u32[144,128]{1,0:T(1,128)}', space=vmem, size = 0x12000, scoped, tag = 'internal scratch']
  %s0 = inlined_call_operand.vmem [shape: f32[2,2,64], index: 0, kind: input, shape index: {}]
  %s1 = inlined_call_operand.vmem [shape: bf16[2,64,16], index: 1, kind: input, shape index: {}]
  %s2 = inlined_call_operand.vmem [shape: f32[2,1,16], index: 2, kind: input, shape index: {}]
  %s3 = inlined_call_operand.vmem [shape: f32[2,2,16], index: 3, kind: output, shape index: {}]
  %s4 = sld [smem:[#allocation0]]
  $region45: #{enc_network_forward.9} parent=0
    _
  %s6 = ssub.s32 1, %s4
  %s7 = scalar_select 0, %s6, %s4
  loop: start=0, step=1, limit=4
  $region2: #{enc_network_forward.9} parent=0 // loop_pre_header
    _
  $region3: #{enc_network_forward.9} parent=0 // loop_header
    %s9 = sphi 0, %s13
    %p10 = scmp.ge.s32.totalorder %s9, 4
    %s19 = sphi 0, %s21
    %s22 = sphi 0, %s19
    %s23 = sphi 0, %s22
    %s39 = sphi 0, %s23
    %s45 = sphi 0, %s47
    %s48 = sphi 0, %s45
    %s49 = sphi 0, %s48
    %s65 = sphi 0, %s49
    %s71 = sphi 0, %s73
    %s74 = sphi 0, %s71
    %s75 = sphi 0, %s74
    %s91 = sphi 0, %s75
    %s97 = sphi 0, %s99
    %s100 = sphi 0, %s97
    %s101 = sphi 0, %s100
    %s117 = sphi 0, %s101
  $region4: #{enc_network_forward.9} parent=0 // loop_header_branch
    %12 = sbr.rel (%p10) target = $region8
  $region5: #{enc_network_forward.9} parent=0 // loop_body
    %s14 = ssub.s32 %s9, 1
    %s15 = ssub.s32 %s9, 2
    %s16 = sadd.s32 %s9, 1
    %s17 = ssub.s32 %s9, %s16
    %p18 = scmp.eq.s32.totalorder %s17, 0
    %s20 = sadd.s32 %s19, 1
    %s21 = scalar_select %p18, %s19, %s20
    %p24 = pneg %p18
    %p25 = scmp.eq.s32.totalorder %s9, 1
    %p26 = por %p24, %p25
    %p27 = scmp.ne.s32.totalorder %s19, %s22
    %p28 = scmp.eq.s32.totalorder %s9, 0
    %p29 = por %p27, %p28
    %p30 = scmp.ne.s32.totalorder %s19, %s22
    %p31 = scmp.eq.s32.totalorder %s14, 1
    %p32 = por %p30, %p31
    %p33 = scmp.ne.s32.totalorder %s22, %s23
    %p34 = scmp.eq.s32.totalorder %s14, 0
    %p35 = por %p33, %p34
    %p36 = scmp.ne.s32.totalorder %s22, %s23
    %p37 = scmp.eq.s32.totalorder %s15, 1
    %p38 = por %p36, %p37
    %p40 = scmp.ne.s32.totalorder %s23, %s39
    %p41 = scmp.eq.s32.totalorder %s15, 0
    %p42 = por %p40, %p41
    %s43 = ssub.s32 %s9, %s16
    %p44 = scmp.eq.s32.totalorder %s43, 0
    %s46 = sadd.s32 %s45, 1
    %s47 = scalar_select %p44, %s45, %s46
    %p50 = pneg %p44
    %p51 = scmp.eq.s32.totalorder %s9, 1
    %p52 = por %p50, %p51
    %p53 = scmp.ne.s32.totalorder %s45, %s48
    %p54 = scmp.eq.s32.totalorder %s9, 0
    %p55 = por %p53, %p54
    %p56 = scmp.ne.s32.totalorder %s45, %s48
    %p57 = scmp.eq.s32.totalorder %s14, 1
    %p58 = por %p56, %p57
    %p59 = scmp.ne.s32.totalorder %s48, %s49
    %p60 = scmp.eq.s32.totalorder %s14, 0
    %p61 = por %p59, %p60
    %p62 = scmp.ne.s32.totalorder %s48, %s49
    %p63 = scmp.eq.s32.totalorder %s15, 1
    %p64 = por %p62, %p63
    %p66 = scmp.ne.s32.totalorder %s49, %s65
    %p67 = scmp.eq.s32.totalorder %s15, 0
    %p68 = por %p66, %p67
    %s69 = ssub.s32 %s9, %s16
    %p70 = scmp.eq.s32.totalorder %s69, 0
    %s72 = sadd.s32 %s71, 1
    %s73 = scalar_select %p70, %s71, %s72
    %p76 = pneg %p70
    %p77 = scmp.eq.s32.totalorder %s9, 1
    %p78 = por %p76, %p77
    %p79 = scmp.ne.s32.totalorder %s71, %s74
    %p80 = scmp.eq.s32.totalorder %s9, 0
    %p81 = por %p79, %p80
    %p82 = scmp.ne.s32.totalorder %s71, %s74
    %p83 = scmp.eq.s32.totalorder %s14, 1
    %p84 = por %p82, %p83
    %p85 = scmp.ne.s32.totalorder %s74, %s75
    %p86 = scmp.eq.s32.totalorder %s14, 0
    %p87 = por %p85, %p86
    %p88 = scmp.ne.s32.totalorder %s74, %s75
    %p89 = scmp.eq.s32.totalorder %s15, 1
    %p90 = por %p88, %p89
    %p92 = scmp.ne.s32.totalorder %s75, %s91
    %p93 = scmp.eq.s32.totalorder %s15, 0
    %p94 = por %p92, %p93
    %s95 = ssub.s32 %s9, %s16
    %p96 = scmp.eq.s32.totalorder %s95, 0
    %s98 = sadd.s32 %s97, 1
    %s99 = scalar_select %p96, %s97, %s98
    %p102 = pneg %p96
    %p103 = scmp.eq.s32.totalorder %s9, 1
    %p104 = por %p102, %p103
    %p105 = scmp.ne.s32.totalorder %s97, %s100
    %p106 = scmp.eq.s32.totalorder %s9, 0
    %p107 = por %p105, %p106
    %p108 = scmp.ne.s32.totalorder %s97, %s100
    %p109 = scmp.eq.s32.totalorder %s14, 1
    %p110 = por %p108, %p109
    %p111 = scmp.ne.s32.totalorder %s100, %s101
    %p112 = scmp.eq.s32.totalorder %s14, 0
    %p113 = por %p111, %p112
    %p114 = scmp.ne.s32.totalorder %s100, %s101
    %p115 = scmp.eq.s32.totalorder %s15, 1
    %p116 = por %p114, %p115
    %p118 = scmp.ne.s32.totalorder %s101, %s117
    %p119 = scmp.eq.s32.totalorder %s15, 0
    %p120 = por %p118, %p119
    %p121 = scmp.le.s32.totalorder 1, %s9
    %p122 = scmp.lt.s32.totalorder %s9, 3
    %p123 = pnand %p121, %p122
    %p124 = pneg %p123
    // Predicated region
    $region9: #{enc_network_forward.9} parent=5 // pred_check
      _
    $region10: #{enc_network_forward.9} parent=5 // pred_check_branch
      %126 = sbr.rel (%p123) target = $region12
    $region11: #{enc_network_forward.9} parent=5 // pred_region
      %s127 = ssub.s32 %s9, 1
    $region12: #{enc_network_forward.9} parent=5 // pred_fallthru
      _
    %p128 = scmp.lt.s32.totalorder %s9, 2
    // Predicated region
    $region13: #{enc_network_forward.9} parent=5 // pred_check
      %p129 = pneg %p128
    $region14: #{enc_network_forward.9} parent=5 // pred_check_branch
      %131 = sbr.rel (%p129) target = $region16
    $region15: #{enc_network_forward.9} parent=5 // pred_region
      // Predicated region
      $region17: #{enc_network_forward.9} parent=15 // pred_check
        %p132 = pneg %p29
      $region18: #{enc_network_forward.9} parent=15 // pred_check_branch
        %134 = sbr.rel (%p132) target = $region20
      $region19: #{enc_network_forward.9} parent=15 // pred_region
        %p135 = scmp.lt.s32.totalorder %s9, 1
        %s136 = scalar_select %p135, %s9, 1
        %s137 = smul.addr %s136, 2
        %s138 = scalar_lea.vmem %s0, %s137
      $region20: #{enc_network_forward.9} parent=15 // pred_fallthru
        _
      // Predicated region
      $region21: #{enc_network_forward.9} parent=15 // pred_check
        %p139 = pneg %p55
      $region22: #{enc_network_forward.9} parent=15 // pred_check_branch
        %141 = sbr.rel (%p139) target = $region24
      $region23: #{enc_network_forward.9} parent=15 // pred_region
        %p142 = scmp.lt.s32.totalorder %s9, 1
        %s143 = scalar_select %p142, %s9, 1
        %s144 = smul.addr %s143, 8
        %s145 = smul.addr %s144, 4
        %s146 = scalar_lea.vmem %s1, %s145
      $region24: #{enc_network_forward.9} parent=15 // pred_fallthru
        _
      // Predicated region
      $region25: #{enc_network_forward.9} parent=15 // pred_check
        %p147 = pneg %p81
      $region26: #{enc_network_forward.9} parent=15 // pred_check_branch
        %149 = sbr.rel (%p147) target = $region28
      $region27: #{enc_network_forward.9} parent=15 // pred_region
        %p150 = scmp.lt.s32.totalorder %s9, 1
        %s151 = scalar_select %p150, %s9, 1
        %s152 = scalar_lea.vmem %s2, %s151
      $region28: #{enc_network_forward.9} parent=15 // pred_fallthru
        _
    $region16: #{enc_network_forward.9} parent=5 // pred_fallthru
      _
    %p153 = scmp.le.s32.totalorder 1, %s9
    %p154 = scmp.lt.s32.totalorder %s9, 3
    %p155 = pnand %p153, %p154
    %p156 = pneg %p155
    // Predicated region
    $region29: #{enc_network_forward.9} parent=5 // pred_check
      _
    $region30: #{enc_network_forward.9} parent=5 // pred_check_branch
      %158 = sbr.rel (%p155) target = $region32
    $region31: #{enc_network_forward.9} parent=5 // pred_region
      %s159 = ssub.s32 %s9, 1
      %p160 = scmp.lt.s32.totalorder %s14, 1
      %s161 = scalar_select %p160, %s14, 1
      %s162 = smul.addr %s161, 2
      %s163 = scalar_lea.vmem %s0, %s162
      %p164 = pneg %p35
      %p165 = pneg %p32
      %p166 = scmp.lt.s32.totalorder %s14, 1
      %s167 = scalar_select %p166, %s14, 1
      %s168 = smul.addr %s167, 8
      %s169 = smul.addr %s168, 4
      %s170 = scalar_lea.vmem %s1, %s169
      %p171 = pneg %p61
      %p172 = pneg %p58
      %p173 = scmp.lt.s32.totalorder %s14, 1
      %s174 = scalar_select %p173, %s14, 1
      %s175 = scalar_lea.vmem %s2, %s174
      %p176 = pneg %p87
      %p177 = pneg %p84
      %p178 = pneg %p113
      %p179 = pneg %p110
      %p180 = scmp.lt.s32.totalorder %s14, 1
      %s181 = scalar_select %p180, %s14, 1
      %s182 = smul.addr %s181, 2
      %s183 = scalar_lea.vmem %s3, %s182
      %p184 = scmp.lt.s32.totalorder %s14, 1
      %s185 = scalar_select %p184, %s14, 1
      %s186 = smul.addr %s185, 2
      %s187 = scalar_lea.vmem %s0, %s186
      %p188 = scmp.lt.s32.totalorder %s14, 1
      %s189 = scalar_select %p188, %s14, 1
      %s190 = smul.addr %s189, 8
      %s191 = smul.addr %s190, 4
      %s192 = scalar_lea.vmem %s1, %s191
      %p193 = scmp.lt.s32.totalorder %s14, 1
      %s194 = scalar_select %p193, %s14, 1
      %s195 = scalar_lea.vmem %s2, %s194
      %p196 = scmp.lt.s32.totalorder %s14, 1
      %s197 = scalar_select %p196, %s14, 1
      %s198 = smul.addr %s197, 2
      %s199 = scalar_lea.vmem %s3, %s198
      %v201 = vld [vmem:[%s187] sm:$0x3]
      %v202 = vpack.c.bf16 %v201, %v201
      %v203 = vld [vmem:[%s192] sm:$0xf]
      %v204 = vld [vmem:[%s192 + $0x4] sm:$0xf]
      %v205 = vld [vmem:[%s192 + $0x8] sm:$0xf]
      %v206 = vld [vmem:[%s192 + $0xc] sm:$0xf]
      %v207 = vld [vmem:[%s192 + $0x10] sm:$0xf]
      %v208 = vld [vmem:[%s192 + $0x14] sm:$0xf]
      %v209 = vld [vmem:[%s192 + $0x18] sm:$0xf]
      %v210 = vld [vmem:[%s192 + $0x1c] sm:$0xf]
      %v211 = vld [vmem:[%s195] sm:$0x1]
      %v213 = vlaneseq
      %v214 = vshrl.u32 %v213, 7
      %v215 = vsub.s32 0, %v214
      %v216 = vrot.slane %v211, %v215
      %v226 = vunpack.c.l.b16 %v203
      %v227 = vunpack.c.l.b16 %v204
      %v228 = vunpack.c.l.b16 %v205
      %v229 = vunpack.c.l.b16 %v206
      %v230 = vunpack.c.l.b16 %v207
      %v231 = vunpack.c.l.b16 %v208
      %v232 = vunpack.c.l.b16 %v209
      %v233 = vunpack.c.l.b16 %v210
      %v234 = vpack.c.b16 %v227, %v226
      %v235 = vpack.c.b16 %v229, %v228
      %v236 = vpack.c.b16 %v231, %v230
      %v237 = vpack.c.b16 %v233, %v232
      %vm242 = vcmask 523264
      %v244 = vsel %vm242, %v202, 0
      %246 = vmatprep.subr.bf16.mxu0 0
      %247 = vmatpush1.bf16.msra.mxu0 0
      %248 = vmatprep.subr.bf16.mxu0 0
      %249 = vmatpush1.bf16.msra.mxu0 0
      %250 = vmatprep.subr.bf16.mxu0 0
      %251 = vmatpush1.bf16.msra.mxu0 0
      %252 = vmatprep.subr.bf16.mxu0 0
      %253 = vmatpush1.bf16.msra.mxu0 0
      %254 = vmatprep.subr.bf16.mxu0 0
      %255 = vmatpush1.bf16.msra.mxu0 %v237
      %256 = vmatprep.subr.bf16.mxu0 0
      %257 = vmatpush1.bf16.msra.mxu0 %v236
      %258 = vmatprep.subr.bf16.mxu0 0
      %259 = vmatpush1.bf16.msra.mxu0 %v235
      %260 = vmatprep.subr.bf16.mxu0 0
      %261 = vmatpush1.bf16.msra.mxu0 %v234
      %262 = vmatprep.subr.bf16.mxu0 0
      %263 = vmatpush2.bf16.msra.mxu0 0
      %264 = vmatprep.subr.bf16.mxu0 0
      %265 = vmatpush2.bf16.msra.mxu0 0
      %266 = vmatprep.subr.bf16.mxu0 0
      %267 = vmatpush2.bf16.msra.mxu0 0
      %268 = vmatprep.subr.bf16.mxu0 0
      %269 = vmatpush2.bf16.msra.mxu0 0
      %270 = vmatprep.subr.bf16.mxu0 0
      %271 = vmatpush2.bf16.msra.mxu0 0
      %272 = vmatprep.subr.bf16.mxu0 0
      %273 = vmatpush2.bf16.msra.mxu0 0
      %274 = vmatprep.subr.bf16.mxu0 0
      %275 = vmatpush2.bf16.msra.mxu0 0
      %276 = vmatprep.subr.bf16.mxu0 0
      %277 = vmatpush2.bf16.msra.mxu0 0
      %278 = vmatprep.mubr.bf16.mxu0 0
      %279 = vmatmul.mubr.bf16.gmra.mxu0 %v244
      %v280 = vpop.f32.mrf.mxu0
      %v281 = vadd.f32 %v216, %v280
      %v282 = vpop.f32.mrf.mxu0
      %v283 = vpop.f32.mrf.mxu0
      %v284 = vpop.f32.mrf.mxu0
      %285 = vdwg.mxu0
      %vm286 = vcmask 123904
      %287 = vst.msk [vmem:[%s199] sm:$0x3] %vm286, %v281
      %p288 = scmp.lt.s32.totalorder %s14, 1
      %s289 = scalar_select %p288, %s14, 1
      %s290 = smul.addr %s289, 2
      %s291 = scalar_lea.vmem %s3, %s290
      // Predicated region
      $region33: #{enc_network_forward.9} parent=31 // pred_check
        %p292 = pneg %p110
      $region34: #{enc_network_forward.9} parent=31 // pred_check_branch
        %294 = sbr.rel (%p292) target = $region36
      $region35: #{enc_network_forward.9} parent=31 // pred_region
        _
      $region36: #{enc_network_forward.9} parent=31 // pred_fallthru
        _
    $region32: #{enc_network_forward.9} parent=5 // pred_fallthru
      _
    %p295 = scmp.le.s32.totalorder 2, %s9
    // Predicated region
    $region37: #{enc_network_forward.9} parent=5 // pred_check
      %p296 = pneg %p295
    $region38: #{enc_network_forward.9} parent=5 // pred_check_branch
      %298 = sbr.rel (%p296) target = $region40
    $region39: #{enc_network_forward.9} parent=5 // pred_region
      %s299 = ssub.s32 %s9, 2
      // Predicated region
      $region41: #{enc_network_forward.9} parent=39 // pred_check
        %p300 = pneg %p116
      $region42: #{enc_network_forward.9} parent=39 // pred_check_branch
        %302 = sbr.rel (%p300) target = $region44
      $region43: #{enc_network_forward.9} parent=39 // pred_region
        %p303 = scmp.lt.s32.totalorder %s15, 1
        %s304 = scalar_select %p303, %s15, 1
        %s305 = smul.addr %s304, 2
        %s306 = scalar_lea.vmem %s3, %s305
      $region44: #{enc_network_forward.9} parent=39 // pred_fallthru
        _
    $region40: #{enc_network_forward.9} parent=5 // pred_fallthru
      _
  $region6: #{enc_network_forward.9} parent=0 // loop_footer
    %s13 = sadd.s32 1, %s9
  $region7: #{enc_network_forward.9} parent=0 // loop_footer_branch
    %8 = sbr.rel target = $region3
  $region8: #{enc_network_forward.9} parent=0 // loop_exit
    _

// kernel: enc_network_forward.10
$region0: #{enc_network_forward.10}
  #allocation0 [shape = 'u32[]', space=smem, size = 0x4, offset = 0x4, fixed_abs, tag = 'smem constant byte address 0x4 - core index']
  #allocation1 [shape = 'u32[144,128]{1,0:T(1,128)}', space=vmem, size = 0x12000, scoped, tag = 'internal scratch']
  %s0 = inlined_call_operand.vmem [shape: f32[2,2,16], index: 0, kind: input, shape index: {}]
  %s1 = inlined_call_operand.vmem [shape: bf16[2,16,32], index: 1, kind: input, shape index: {}]
  %s2 = inlined_call_operand.vmem [shape: f32[2,1,32], index: 2, kind: input, shape index: {}]
  %s3 = inlined_call_operand.vmem [shape: f32[2,2,32], index: 3, kind: output, shape index: {}]
  %s4 = sld [smem:[#allocation0]]
  $region45: #{enc_network_forward.10} parent=0
    _
  %s6 = ssub.s32 1, %s4
  %s7 = scalar_select 0, %s6, %s4
  loop: start=0, step=1, limit=4
  $region2: #{enc_network_forward.10} parent=0 // loop_pre_header
    _
  $region3: #{enc_network_forward.10} parent=0 // loop_header
    %s9 = sphi 0, %s13
    %p10 = scmp.ge.s32.totalorder %s9, 4
    %s19 = sphi 0, %s21
    %s22 = sphi 0, %s19
    %s23 = sphi 0, %s22
    %s39 = sphi 0, %s23
    %s45 = sphi 0, %s47
    %s48 = sphi 0, %s45
    %s49 = sphi 0, %s48
    %s65 = sphi 0, %s49
    %s71 = sphi 0, %s73
    %s74 = sphi 0, %s71
    %s75 = sphi 0, %s74
    %s91 = sphi 0, %s75
    %s97 = sphi 0, %s99
    %s100 = sphi 0, %s97
    %s101 = sphi 0, %s100
    %s117 = sphi 0, %s101
  $region4: #{enc_network_forward.10} parent=0 // loop_header_branch
    %12 = sbr.rel (%p10) target = $region8
  $region5: #{enc_network_forward.10} parent=0 // loop_body
    %s14 = ssub.s32 %s9, 1
    %s15 = ssub.s32 %s9, 2
    %s16 = sadd.s32 %s9, 1
    %s17 = ssub.s32 %s9, %s16
    %p18 = scmp.eq.s32.totalorder %s17, 0
    %s20 = sadd.s32 %s19, 1
    %s21 = scalar_select %p18, %s19, %s20
    %p24 = pneg %p18
    %p25 = scmp.eq.s32.totalorder %s9, 1
    %p26 = por %p24, %p25
    %p27 = scmp.ne.s32.totalorder %s19, %s22
    %p28 = scmp.eq.s32.totalorder %s9, 0
    %p29 = por %p27, %p28
    %p30 = scmp.ne.s32.totalorder %s19, %s22
    %p31 = scmp.eq.s32.totalorder %s14, 1
    %p32 = por %p30, %p31
    %p33 = scmp.ne.s32.totalorder %s22, %s23
    %p34 = scmp.eq.s32.totalorder %s14, 0
    %p35 = por %p33, %p34
    %p36 = scmp.ne.s32.totalorder %s22, %s23
    %p37 = scmp.eq.s32.totalorder %s15, 1
    %p38 = por %p36, %p37
    %p40 = scmp.ne.s32.totalorder %s23, %s39
    %p41 = scmp.eq.s32.totalorder %s15, 0
    %p42 = por %p40, %p41
    %s43 = ssub.s32 %s9, %s16
    %p44 = scmp.eq.s32.totalorder %s43, 0
    %s46 = sadd.s32 %s45, 1
    %s47 = scalar_select %p44, %s45, %s46
    %p50 = pneg %p44
    %p51 = scmp.eq.s32.totalorder %s9, 1
    %p52 = por %p50, %p51
    %p53 = scmp.ne.s32.totalorder %s45, %s48
    %p54 = scmp.eq.s32.totalorder %s9, 0
    %p55 = por %p53, %p54
    %p56 = scmp.ne.s32.totalorder %s45, %s48
    %p57 = scmp.eq.s32.totalorder %s14, 1
    %p58 = por %p56, %p57
    %p59 = scmp.ne.s32.totalorder %s48, %s49
    %p60 = scmp.eq.s32.totalorder %s14, 0
    %p61 = por %p59, %p60
    %p62 = scmp.ne.s32.totalorder %s48, %s49
    %p63 = scmp.eq.s32.totalorder %s15, 1
    %p64 = por %p62, %p63
    %p66 = scmp.ne.s32.totalorder %s49, %s65
    %p67 = scmp.eq.s32.totalorder %s15, 0
    %p68 = por %p66, %p67
    %s69 = ssub.s32 %s9, %s16
    %p70 = scmp.eq.s32.totalorder %s69, 0
    %s72 = sadd.s32 %s71, 1
    %s73 = scalar_select %p70, %s71, %s72
    %p76 = pneg %p70
    %p77 = scmp.eq.s32.totalorder %s9, 1
    %p78 = por %p76, %p77
    %p79 = scmp.ne.s32.totalorder %s71, %s74
    %p80 = scmp.eq.s32.totalorder %s9, 0
    %p81 = por %p79, %p80
    %p82 = scmp.ne.s32.totalorder %s71, %s74
    %p83 = scmp.eq.s32.totalorder %s14, 1
    %p84 = por %p82, %p83
    %p85 = scmp.ne.s32.totalorder %s74, %s75
    %p86 = scmp.eq.s32.totalorder %s14, 0
    %p87 = por %p85, %p86
    %p88 = scmp.ne.s32.totalorder %s74, %s75
    %p89 = scmp.eq.s32.totalorder %s15, 1
    %p90 = por %p88, %p89
    %p92 = scmp.ne.s32.totalorder %s75, %s91
    %p93 = scmp.eq.s32.totalorder %s15, 0
    %p94 = por %p92, %p93
    %s95 = ssub.s32 %s9, %s16
    %p96 = scmp.eq.s32.totalorder %s95, 0
    %s98 = sadd.s32 %s97, 1
    %s99 = scalar_select %p96, %s97, %s98
    %p102 = pneg %p96
    %p103 = scmp.eq.s32.totalorder %s9, 1
    %p104 = por %p102, %p103
    %p105 = scmp.ne.s32.totalorder %s97, %s100
    %p106 = scmp.eq.s32.totalorder %s9, 0
    %p107 = por %p105, %p106
    %p108 = scmp.ne.s32.totalorder %s97, %s100
    %p109 = scmp.eq.s32.totalorder %s14, 1
    %p110 = por %p108, %p109
    %p111 = scmp.ne.s32.totalorder %s100, %s101
    %p112 = scmp.eq.s32.totalorder %s14, 0
    %p113 = por %p111, %p112
    %p114 = scmp.ne.s32.totalorder %s100, %s101
    %p115 = scmp.eq.s32.totalorder %s15, 1
    %p116 = por %p114, %p115
    %p118 = scmp.ne.s32.totalorder %s101, %s117
    %p119 = scmp.eq.s32.totalorder %s15, 0
    %p120 = por %p118, %p119
    %p121 = scmp.le.s32.totalorder 1, %s9
    %p122 = scmp.lt.s32.totalorder %s9, 3
    %p123 = pnand %p121, %p122
    %p124 = pneg %p123
    // Predicated region
    $region9: #{enc_network_forward.10} parent=5 // pred_check
      _
    $region10: #{enc_network_forward.10} parent=5 // pred_check_branch
      %126 = sbr.rel (%p123) target = $region12
    $region11: #{enc_network_forward.10} parent=5 // pred_region
      %s127 = ssub.s32 %s9, 1
    $region12: #{enc_network_forward.10} parent=5 // pred_fallthru
      _
    %p128 = scmp.lt.s32.totalorder %s9, 2
    // Predicated region
    $region13: #{enc_network_forward.10} parent=5 // pred_check
      %p129 = pneg %p128
    $region14: #{enc_network_forward.10} parent=5 // pred_check_branch
      %131 = sbr.rel (%p129) target = $region16
    $region15: #{enc_network_forward.10} parent=5 // pred_region
      // Predicated region
      $region17: #{enc_network_forward.10} parent=15 // pred_check
        %p132 = pneg %p29
      $region18: #{enc_network_forward.10} parent=15 // pred_check_branch
        %134 = sbr.rel (%p132) target = $region20
      $region19: #{enc_network_forward.10} parent=15 // pred_region
        %p135 = scmp.lt.s32.totalorder %s9, 1
        %s136 = scalar_select %p135, %s9, 1
        %s137 = smul.addr %s136, 2
        %s138 = scalar_lea.vmem %s0, %s137
      $region20: #{enc_network_forward.10} parent=15 // pred_fallthru
        _
      // Predicated region
      $region21: #{enc_network_forward.10} parent=15 // pred_check
        %p139 = pneg %p55
      $region22: #{enc_network_forward.10} parent=15 // pred_check_branch
        %141 = sbr.rel (%p139) target = $region24
      $region23: #{enc_network_forward.10} parent=15 // pred_region
        %p142 = scmp.lt.s32.totalorder %s9, 1
        %s143 = scalar_select %p142, %s9, 1
        %s144 = smul.addr %s143, 2
        %s145 = smul.addr %s144, 4
        %s146 = scalar_lea.vmem %s1, %s145
      $region24: #{enc_network_forward.10} parent=15 // pred_fallthru
        _
      // Predicated region
      $region25: #{enc_network_forward.10} parent=15 // pred_check
        %p147 = pneg %p81
      $region26: #{enc_network_forward.10} parent=15 // pred_check_branch
        %149 = sbr.rel (%p147) target = $region28
      $region27: #{enc_network_forward.10} parent=15 // pred_region
        %p150 = scmp.lt.s32.totalorder %s9, 1
        %s151 = scalar_select %p150, %s9, 1
        %s152 = scalar_lea.vmem %s2, %s151
      $region28: #{enc_network_forward.10} parent=15 // pred_fallthru
        _
    $region16: #{enc_network_forward.10} parent=5 // pred_fallthru
      _
    %p153 = scmp.le.s32.totalorder 1, %s9
    %p154 = scmp.lt.s32.totalorder %s9, 3
    %p155 = pnand %p153, %p154
    %p156 = pneg %p155
    // Predicated region
    $region29: #{enc_network_forward.10} parent=5 // pred_check
      _
    $region30: #{enc_network_forward.10} parent=5 // pred_check_branch
      %158 = sbr.rel (%p155) target = $region32
    $region31: #{enc_network_forward.10} parent=5 // pred_region
      %s159 = ssub.s32 %s9, 1
      %p160 = scmp.lt.s32.totalorder %s14, 1
      %s161 = scalar_select %p160, %s14, 1
      %s162 = smul.addr %s161, 2
      %s163 = scalar_lea.vmem %s0, %s162
      %p164 = pneg %p35
      %p165 = pneg %p32
      %p166 = scmp.lt.s32.totalorder %s14, 1
      %s167 = scalar_select %p166, %s14, 1
      %s168 = smul.addr %s167, 2
      %s169 = smul.addr %s168, 4
      %s170 = scalar_lea.vmem %s1, %s169
      %p171 = pneg %p61
      %p172 = pneg %p58
      %p173 = scmp.lt.s32.totalorder %s14, 1
      %s174 = scalar_select %p173, %s14, 1
      %s175 = scalar_lea.vmem %s2, %s174
      %p176 = pneg %p87
      %p177 = pneg %p84
      %p178 = pneg %p113
      %p179 = pneg %p110
      %p180 = scmp.lt.s32.totalorder %s14, 1
      %s181 = scalar_select %p180, %s14, 1
      %s182 = smul.addr %s181, 2
      %s183 = scalar_lea.vmem %s3, %s182
      %p184 = scmp.lt.s32.totalorder %s14, 1
      %s185 = scalar_select %p184, %s14, 1
      %s186 = smul.addr %s185, 2
      %s187 = scalar_lea.vmem %s0, %s186
      %p188 = scmp.lt.s32.totalorder %s14, 1
      %s189 = scalar_select %p188, %s14, 1
      %s190 = smul.addr %s189, 2
      %s191 = smul.addr %s190, 4
      %s192 = scalar_lea.vmem %s1, %s191
      %p193 = scmp.lt.s32.totalorder %s14, 1
      %s194 = scalar_select %p193, %s14, 1
      %s195 = scalar_lea.vmem %s2, %s194
      %p196 = scmp.lt.s32.totalorder %s14, 1
      %s197 = scalar_select %p196, %s14, 1
      %s198 = smul.addr %s197, 2
      %s199 = scalar_lea.vmem %s3, %s198
      %v201 = vld [vmem:[%s187] sm:$0x3]
      %v202 = vtanh.pop %v201
      %v203 = vpack.c.bf16 %v202, %v202
      %v204 = vld [vmem:[%s192] sm:$0xf]
      %v205 = vld [vmem:[%s192 + $0x4] sm:$0xf]
      %v206 = vld [vmem:[%s195] sm:$0x1]
      %v208 = vlaneseq
      %v209 = vshrl.u32 %v208, 7
      %v210 = vsub.s32 0, %v209
      %v211 = vrot.slane %v206, %v210
      %v215 = vunpack.c.l.b16 %v204
      %v216 = vunpack.c.l.b16 %v205
      %v217 = vpack.c.b16 %v216, %v215
      %vm219 = vcmask 130048
      %v221 = vsel %vm219, %v203, 0
      %223 = vmatprep.subr.bf16.mxu0 0
      %224 = vmatpush1.bf16.msra.mxu0 0
      %225 = vmatprep.subr.bf16.mxu0 0
      %226 = vmatpush1.bf16.msra.mxu0 0
      %227 = vmatprep.subr.bf16.mxu0 0
      %228 = vmatpush1.bf16.msra.mxu0 0
      %229 = vmatprep.subr.bf16.mxu0 0
      %230 = vmatpush1.bf16.msra.mxu0 0
      %231 = vmatprep.subr.bf16.mxu0 0
      %232 = vmatpush1.bf16.msra.mxu0 0
      %233 = vmatprep.subr.bf16.mxu0 0
      %234 = vmatpush1.bf16.msra.mxu0 0
      %235 = vmatprep.subr.bf16.mxu0 0
      %236 = vmatpush1.bf16.msra.mxu0 0
      %237 = vmatprep.subr.bf16.mxu0 0
      %238 = vmatpush1.bf16.msra.mxu0 %v217
      %239 = vmatprep.subr.bf16.mxu0 0
      %240 = vmatpush2.bf16.msra.mxu0 0
      %241 = vmatprep.subr.bf16.mxu0 0
      %242 = vmatpush2.bf16.msra.mxu0 0
      %243 = vmatprep.subr.bf16.mxu0 0
      %244 = vmatpush2.bf16.msra.mxu0 0
      %245 = vmatprep.subr.bf16.mxu0 0
      %246 = vmatpush2.bf16.msra.mxu0 0
      %247 = vmatprep.subr.bf16.mxu0 0
      %248 = vmatpush2.bf16.msra.mxu0 0
      %249 = vmatprep.subr.bf16.mxu0 0
      %250 = vmatpush2.bf16.msra.mxu0 0
      %251 = vmatprep.subr.bf16.mxu0 0
      %252 = vmatpush2.bf16.msra.mxu0 0
      %253 = vmatprep.subr.bf16.mxu0 0
      %254 = vmatpush2.bf16.msra.mxu0 0
      %255 = vmatprep.mubr.bf16.mxu0 0
      %256 = vmatmul.mubr.bf16.gmra.mxu0 %v221
      %v257 = vpop.f32.mrf.mxu0
      %v258 = vadd.f32 %v211, %v257
      %v259 = vpop.f32.mrf.mxu0
      %v260 = vpop.f32.mrf.mxu0
      %v261 = vpop.f32.mrf.mxu0
      %262 = vdwg.mxu0
      %vm263 = vcmask 254976
      %264 = vst.msk [vmem:[%s199] sm:$0x3] %vm263, %v258
      %p265 = scmp.lt.s32.totalorder %s14, 1
      %s266 = scalar_select %p265, %s14, 1
      %s267 = smul.addr %s266, 2
      %s268 = scalar_lea.vmem %s3, %s267
      // Predicated region
      $region33: #{enc_network_forward.10} parent=31 // pred_check
        %p269 = pneg %p110
      $region34: #{enc_network_forward.10} parent=31 // pred_check_branch
        %271 = sbr.rel (%p269) target = $region36
      $region35: #{enc_network_forward.10} parent=31 // pred_region
        _
      $region36: #{enc_network_forward.10} parent=31 // pred_fallthru
        _
    $region32: #{enc_network_forward.10} parent=5 // pred_fallthru
      _
    %p272 = scmp.le.s32.totalorder 2, %s9
    // Predicated region
    $region37: #{enc_network_forward.10} parent=5 // pred_check
      %p273 = pneg %p272
    $region38: #{enc_network_forward.10} parent=5 // pred_check_branch
      %275 = sbr.rel (%p273) target = $region40
    $region39: #{enc_network_forward.10} parent=5 // pred_region
      %s276 = ssub.s32 %s9, 2
      // Predicated region
      $region41: #{enc_network_forward.10} parent=39 // pred_check
        %p277 = pneg %p116
      $region42: #{enc_network_forward.10} parent=39 // pred_check_branch
        %279 = sbr.rel (%p277) target = $region44
      $region43: #{enc_network_forward.10} parent=39 // pred_region
        %p280 = scmp.lt.s32.totalorder %s15, 1
        %s281 = scalar_select %p280, %s15, 1
        %s282 = smul.addr %s281, 2
        %s283 = scalar_lea.vmem %s3, %s282
      $region44: #{enc_network_forward.10} parent=39 // pred_fallthru
        _
    $region40: #{enc_network_forward.10} parent=5 // pred_fallthru
      _
  $region6: #{enc_network_forward.10} parent=0 // loop_footer
    %s13 = sadd.s32 1, %s9
  $region7: #{enc_network_forward.10} parent=0 // loop_footer_branch
    %8 = sbr.rel target = $region3
  $region8: #{enc_network_forward.10} parent=0 // loop_exit
    _

// kernel: enc_network_forward.8
$region0: #{enc_network_forward.8}
  #allocation0 [shape = 'u32[]', space=smem, size = 0x4, offset = 0x4, fixed_abs, tag = 'smem constant byte address 0x4 - core index']
  #allocation1 [shape = 'u32[144,128]{1,0:T(1,128)}', space=vmem, size = 0x12000, scoped, tag = 'internal scratch']
  #allocation2 [shape = 'f32[8,32]{1,0:T(8,128)}', space=vmem, size = 0x1000, scoped, tag = 'scratch operand']
  #allocation3 [shape = 's32[1]{0}', space=sflag, size = 0x4, scoped, tag = 'scoped memory for enc_network_forward.8']
  #allocation4 [shape = 'u8[512]{0}', space=smem, size = 0x200, scoped, tag = 'prefetched SMEM operand 0']
  %s0 = inlined_call_operand.vmem [shape: s32[4], index: 0, kind: input, shape index: {}]
  %s1 = inlined_call_operand.vmem [shape: f32[4,2,8,96], index: 1, kind: input, shape index: {}]
  %s2 = inlined_call_operand.vmem [shape: bf16[4,32,96], index: 2, kind: input, shape index: {}]
  %s3 = inlined_call_operand.vmem [shape: f32[4,1,32], index: 3, kind: input, shape index: {}]
  %s4 = inlined_call_operand.vmem [shape: f32[4,2,8,32], index: 4, kind: output, shape index: {}]
  %s5 = sld [smem:[#allocation0]]
  $region49: #{enc_network_forward.8} parent=0
    _
  %s7 = ssub.s32 1, %s5
  %s8 = scalar_select 0, %s7, %s5
  %s9 = sshll.u32 %s0, 4
  %s10 = int_to_ptr.vmem [resolvable:$true] %s9
  %12 = dma.vmem_to_smem %s10, 16, [#allocation4], [#allocation3]
  %13 = dma.done [#allocation3], 16
  %14 = sfence
  loop: start=0, step=1, limit=10
  $region2: #{enc_network_forward.8} parent=0 // loop_pre_header
    _
  $region3: #{enc_network_forward.8} parent=0 // loop_header
    %s16 = sphi 0, %s20
    %p17 = scmp.ge.s32.totalorder %s16, 10
    %s23 = sphi 0, %s35
    %s24 = sphi 0, %s31
    %s25 = sphi 0, %s23
    %s26 = sphi 0, %s24
    %s27 = sphi 0, %s25
    %s28 = sphi 0, %s26
    %s50 = sphi 0, %s52
    %s53 = sphi 0, %s50
    %s54 = sphi 0, %s53
    %s70 = sphi 0, %s54
    %s76 = sphi 0, %s78
    %s79 = sphi 0, %s76
    %s80 = sphi 0, %s79
    %s96 = sphi 0, %s80
    %s102 = sphi 0, %s104
    %s105 = sphi 0, %s102
    %s106 = sphi 0, %s105
    %s122 = sphi 0, %s106
    %s140 = sphi 0, %s142
    %s143 = sphi 0, %s140
    %s144 = sphi 0, %s143
    %s160 = sphi 0, %s144
  $region4: #{enc_network_forward.8} parent=0 // loop_header_branch
    %19 = sbr.rel (%p17) target = $region8
  $region5: #{enc_network_forward.8} parent=0 // loop_body
    %s21 = ssub.s32 %s16, 1
    %s22 = ssub.s32 %s16, 2
    %s29 = sadd.s32 1, %s24
    %p30 = scmp.ge.s32.totalorder %s29, 2
    %s31 = scalar_select %p30, 0, %s29
    %s32 = sadd.s32 1, %s23
    %s33 = scalar_select %p30, %s32, %s23
    %p34 = scmp.ge.s32.totalorder %s33, 4
    %s35 = scalar_select %p34, 0, %s33
    %s36 = sld [smem:[#allocation4 + %s23]]
    %s37 = smul.u32 %s24, 2
    %s38 = ssub.s32 1, %s37
    %s39 = smul.u32 %s36, %s38
    %s40 = sadd.s32 %s24, %s39
    %s41 = sld [smem:[#allocation4 + %s35]]
    %s42 = smul.u32 %s31, 2
    %s43 = ssub.s32 1, %s42
    %s44 = smul.u32 %s41, %s43
    %s45 = sadd.s32 %s31, %s44
    %s46 = ssub.s32 %s23, %s35
    %s47 = ssub.s32 %s40, %s45
    %s48 = sor.u32 %s46, %s47
    %p49 = scmp.eq.s32.totalorder %s48, 0
    %s51 = sadd.s32 %s50, 1
    %s52 = scalar_select %p49, %s50, %s51
    %p55 = pneg %p49
    %p56 = scmp.eq.s32.totalorder %s16, 7
    %p57 = por %p55, %p56
    %p58 = scmp.ne.s32.totalorder %s50, %s53
    %p59 = scmp.eq.s32.totalorder %s16, 0
    %p60 = por %p58, %p59
    %p61 = scmp.ne.s32.totalorder %s50, %s53
    %p62 = scmp.eq.s32.totalorder %s21, 7
    %p63 = por %p61, %p62
    %p64 = scmp.ne.s32.totalorder %s53, %s54
    %p65 = scmp.eq.s32.totalorder %s21, 0
    %p66 = por %p64, %p65
    %p67 = scmp.ne.s32.totalorder %s53, %s54
    %p68 = scmp.eq.s32.totalorder %s22, 7
    %p69 = por %p67, %p68
    %p71 = scmp.ne.s32.totalorder %s54, %s70
    %p72 = scmp.eq.s32.totalorder %s22, 0
    %p73 = por %p71, %p72
    %s74 = ssub.s32 %s23, %s35
    %p75 = scmp.eq.s32.totalorder %s74, 0
    %s77 = sadd.s32 %s76, 1
    %s78 = scalar_select %p75, %s76, %s77
    %p81 = pneg %p75
    %p82 = scmp.eq.s32.totalorder %s16, 7
    %p83 = por %p81, %p82
    %p84 = scmp.ne.s32.totalorder %s76, %s79
    %p85 = scmp.eq.s32.totalorder %s16, 0
    %p86 = por %p84, %p85
    %p87 = scmp.ne.s32.totalorder %s76, %s79
    %p88 = scmp.eq.s32.totalorder %s21, 7
    %p89 = por %p87, %p88
    %p90 = scmp.ne.s32.totalorder %s79, %s80
    %p91 = scmp.eq.s32.totalorder %s21, 0
    %p92 = por %p90, %p91
    %p93 = scmp.ne.s32.totalorder %s79, %s80
    %p94 = scmp.eq.s32.totalorder %s22, 7
    %p95 = por %p93, %p94
    %p97 = scmp.ne.s32.totalorder %s80, %s96
    %p98 = scmp.eq.s32.totalorder %s22, 0
    %p99 = por %p97, %p98
    %s100 = ssub.s32 %s23, %s35
    %p101 = scmp.eq.s32.totalorder %s100, 0
    %s103 = sadd.s32 %s102, 1
    %s104 = scalar_select %p101, %s102, %s103
    %p107 = pneg %p101
    %p108 = scmp.eq.s32.totalorder %s16, 7
    %p109 = por %p107, %p108
    %p110 = scmp.ne.s32.totalorder %s102, %s105
    %p111 = scmp.eq.s32.totalorder %s16, 0
    %p112 = por %p110, %p111
    %p113 = scmp.ne.s32.totalorder %s102, %s105
    %p114 = scmp.eq.s32.totalorder %s21, 7
    %p115 = por %p113, %p114
    %p116 = scmp.ne.s32.totalorder %s105, %s106
    %p117 = scmp.eq.s32.totalorder %s21, 0
    %p118 = por %p116, %p117
    %p119 = scmp.ne.s32.totalorder %s105, %s106
    %p120 = scmp.eq.s32.totalorder %s22, 7
    %p121 = por %p119, %p120
    %p123 = scmp.ne.s32.totalorder %s106, %s122
    %p124 = scmp.eq.s32.totalorder %s22, 0
    %p125 = por %p123, %p124
    %s126 = sld [smem:[#allocation4 + %s23]]
    %s127 = smul.u32 %s24, 2
    %s128 = ssub.s32 1, %s127
    %s129 = smul.u32 %s126, %s128
    %s130 = sadd.s32 %s24, %s129
    %s131 = sld [smem:[#allocation4 + %s35]]
    %s132 = smul.u32 %s31, 2
    %s133 = ssub.s32 1, %s132
    %s134 = smul.u32 %s131, %s133
    %s135 = sadd.s32 %s31, %s134
    %s136 = ssub.s32 %s23, %s35
    %s137 = ssub.s32 %s130, %s135
    %s138 = sor.u32 %s136, %s137
    %p139 = scmp.eq.s32.totalorder %s138, 0
    %s141 = sadd.s32 %s140, 1
    %s142 = scalar_select %p139, %s140, %s141
    %p145 = pneg %p139
    %p146 = scmp.eq.s32.totalorder %s16, 7
    %p147 = por %p145, %p146
    %p148 = scmp.ne.s32.totalorder %s140, %s143
    %p149 = scmp.eq.s32.totalorder %s16, 0
    %p150 = por %p148, %p149
    %p151 = scmp.ne.s32.totalorder %s140, %s143
    %p152 = scmp.eq.s32.totalorder %s21, 7
    %p153 = por %p151, %p152
    %p154 = scmp.ne.s32.totalorder %s143, %s144
    %p155 = scmp.eq.s32.totalorder %s21, 0
    %p156 = por %p154, %p155
    %p157 = scmp.ne.s32.totalorder %s143, %s144
    %p158 = scmp.eq.s32.totalorder %s22, 7
    %p159 = por %p157, %p158
    %p161 = scmp.ne.s32.totalorder %s144, %s160
    %p162 = scmp.eq.s32.totalorder %s22, 0
    %p163 = por %p161, %p162
    %p164 = scmp.le.s32.totalorder 1, %s16
    %p165 = scmp.lt.s32.totalorder %s16, 9
    %p166 = pnand %p164, %p165
    %p167 = pneg %p166
    // Predicated region
    $region9: #{enc_network_forward.8} parent=5 // pred_check
      _
    $region10: #{enc_network_forward.8} parent=5 // pred_check_branch
      %169 = sbr.rel (%p166) target = $region12
    $region11: #{enc_network_forward.8} parent=5 // pred_region
      %s170 = ssub.s32 %s16, 1
    $region12: #{enc_network_forward.8} parent=5 // pred_fallthru
      _
    %p171 = scmp.lt.s32.totalorder %s16, 8
    // Predicated region
    $region13: #{enc_network_forward.8} parent=5 // pred_check
      %p172 = pneg %p171
    $region14: #{enc_network_forward.8} parent=5 // pred_check_branch
      %174 = sbr.rel (%p172) target = $region16
    $region15: #{enc_network_forward.8} parent=5 // pred_region
      // Predicated region
      $region17: #{enc_network_forward.8} parent=15 // pred_check
        %p175 = pneg %p60
      $region18: #{enc_network_forward.8} parent=15 // pred_check_branch
        %177 = sbr.rel (%p175) target = $region20
      $region19: #{enc_network_forward.8} parent=15 // pred_region
        %s178 = sld [smem:[#allocation4 + %s23]]
        %s179 = smul.u32 %s24, 2
        %s180 = ssub.s32 1, %s179
        %s181 = smul.u32 %s178, %s180
        %s182 = sadd.s32 %s24, %s181
        %p183 = scmp.lt.s32.totalorder %s23, 3
        %s184 = scalar_select %p183, %s23, 3
        %p185 = scmp.lt.s32.totalorder %s182, 1
        %s186 = scalar_select %p185, %s182, 1
        %s187 = smul.addr %s184, 2
        %s188 = sadd.s32 %s186, %s187
        %s189 = smul.addr %s188, 8
        %s190 = scalar_lea.vmem %s1, %s189
        %s191 = sld [smem:[#allocation4 + %s23]]
        %s192 = smul.u32 %s24, 2
        %s193 = ssub.s32 1, %s192
        %s194 = smul.u32 %s191, %s193
        %s195 = sadd.s32 %s24, %s194
      $region20: #{enc_network_forward.8} parent=15 // pred_fallthru
        _
      // Predicated region
      $region21: #{enc_network_forward.8} parent=15 // pred_check
        %p196 = pneg %p86
      $region22: #{enc_network_forward.8} parent=15 // pred_check_branch
        %198 = sbr.rel (%p196) target = $region24
      $region23: #{enc_network_forward.8} parent=15 // pred_region
        %p199 = scmp.lt.s32.totalorder %s23, 3
        %s200 = scalar_select %p199, %s23, 3
        %s201 = smul.addr %s200, 4
        %s202 = smul.addr %s201, 4
        %s203 = scalar_lea.vmem %s2, %s202
      $region24: #{enc_network_forward.8} parent=15 // pred_fallthru
        _
      // Predicated region
      $region25: #{enc_network_forward.8} parent=15 // pred_check
        %p204 = pneg %p112
      $region26: #{enc_network_forward.8} parent=15 // pred_check_branch
        %206 = sbr.rel (%p204) target = $region28
      $region27: #{enc_network_forward.8} parent=15 // pred_region
        %p207 = scmp.lt.s32.totalorder %s23, 3
        %s208 = scalar_select %p207, %s23, 3
        %s209 = scalar_lea.vmem %s3, %s208
      $region28: #{enc_network_forward.8} parent=15 // pred_fallthru
        _
    $region16: #{enc_network_forward.8} parent=5 // pred_fallthru
      _
    %p210 = scmp.le.s32.totalorder 1, %s16
    %p211 = scmp.lt.s32.totalorder %s16, 9
    %p212 = pnand %p210, %p211
    %p213 = pneg %p212
    // Predicated region
    $region29: #{enc_network_forward.8} parent=5 // pred_check
      _
    $region30: #{enc_network_forward.8} parent=5 // pred_check_branch
      %215 = sbr.rel (%p212) target = $region32
    $region31: #{enc_network_forward.8} parent=5 // pred_region
      %s216 = ssub.s32 %s16, 1
      %s217 = sld [smem:[#allocation4 + %s25]]
      %s218 = smul.u32 %s26, 2
      %s219 = ssub.s32 1, %s218
      %s220 = smul.u32 %s217, %s219
      %s221 = sadd.s32 %s26, %s220
      %p222 = scmp.lt.s32.totalorder %s25, 3
      %s223 = scalar_select %p222, %s25, 3
      %p224 = scmp.lt.s32.totalorder %s221, 1
      %s225 = scalar_select %p224, %s221, 1
      %s226 = smul.addr %s223, 2
      %s227 = sadd.s32 %s225, %s226
      %s228 = smul.addr %s227, 8
      %s229 = scalar_lea.vmem %s1, %s228
      %p230 = pneg %p66
      %p231 = pneg %p63
      %p232 = scmp.lt.s32.totalorder %s25, 3
      %s233 = scalar_select %p232, %s25, 3
      %s234 = smul.addr %s233, 4
      %s235 = smul.addr %s234, 4
      %s236 = scalar_lea.vmem %s2, %s235
      %p237 = pneg %p92
      %p238 = pneg %p89
      %p239 = scmp.lt.s32.totalorder %s25, 3
      %s240 = scalar_select %p239, %s25, 3
      %s241 = scalar_lea.vmem %s3, %s240
      %p242 = pneg %p118
      %p243 = pneg %p115
      %p244 = pneg %p156
      %p245 = pneg %p153
      %s246 = sld [smem:[#allocation4 + %s25]]
      %s247 = smul.u32 %s26, 2
      %s248 = ssub.s32 1, %s247
      %s249 = smul.u32 %s246, %s248
      %s250 = sadd.s32 %s26, %s249
      %p251 = scmp.lt.s32.totalorder %s25, 3
      %s252 = scalar_select %p251, %s25, 3
      %p253 = scmp.lt.s32.totalorder %s250, 1
      %s254 = scalar_select %p253, %s250, 1
      %s255 = smul.addr %s252, 2
      %s256 = sadd.s32 %s254, %s255
      %s257 = smul.addr %s256, 8
      %s258 = scalar_lea.vmem %s4, %s257
      %s259 = sld [smem:[#allocation4 + %s25]]
      %s260 = smul.u32 %s26, 2
      %s261 = ssub.s32 1, %s260
      %s262 = smul.u32 %s259, %s261
      %s263 = sadd.s32 %s26, %s262
      %p264 = scmp.lt.s32.totalorder %s25, 3
      %s265 = scalar_select %p264, %s25, 3
      %p266 = scmp.lt.s32.totalorder %s263, 1
      %s267 = scalar_select %p266, %s263, 1
      %s268 = smul.addr %s265, 2
      %s269 = sadd.s32 %s267, %s268
      %s270 = smul.addr %s269, 8
      %s271 = scalar_lea.vmem %s1, %s270
      %s272 = sld [smem:[#allocation4 + %s25]]
      %s273 = smul.u32 %s26, 2
      %s274 = ssub.s32 1, %s273
      %s275 = smul.u32 %s272, %s274
      %s276 = sadd.s32 %s26, %s275
      %p277 = scmp.lt.s32.totalorder %s25, 3
      %s278 = scalar_select %p277, %s25, 3
      %s279 = smul.addr %s278, 4
      %s280 = smul.addr %s279, 4
      %s281 = scalar_lea.vmem %s2, %s280
      %p282 = scmp.lt.s32.totalorder %s25, 3
      %s283 = scalar_select %p282, %s25, 3
      %s284 = scalar_lea.vmem %s3, %s283
      %s285 = sld [smem:[#allocation4 + %s25]]
      %s286 = smul.u32 %s26, 2
      %s287 = ssub.s32 1, %s286
      %s288 = smul.u32 %s285, %s287
      %s289 = sadd.s32 %s26, %s288
      %p290 = scmp.lt.s32.totalorder %s25, 3
      %s291 = scalar_select %p290, %s25, 3
      %p292 = scmp.lt.s32.totalorder %s289, 1
      %s293 = scalar_select %p292, %s289, 1
      %s294 = smul.addr %s291, 2
      %s295 = sadd.s32 %s293, %s294
      %s296 = smul.addr %s295, 8
      %s297 = scalar_lea.vmem %s4, %s296
      %s298 = sld [smem:[#allocation4 + %s25]]
      %s299 = smul.u32 %s26, 2
      %s300 = ssub.s32 1, %s299
      %s301 = smul.u32 %s298, %s300
      %s302 = sadd.s32 %s26, %s301
      %p304 = scmp.eq.s32.totalorder %s26, 0
      // Predicated region
      $region33: #{enc_network_forward.8} parent=31 // pred_check
        %p305 = pneg %p304
      $region34: #{enc_network_forward.8} parent=31 // pred_check_branch
        %307 = sbr.rel (%p305) target = $region36
      $region35: #{enc_network_forward.8} parent=31 // pred_region
        %vm308 = vcmask 261120
        %309 = vst.msk [vmem:[#allocation2] sm:$0xff] %vm308, 0.0
      $region36: #{enc_network_forward.8} parent=31 // pred_fallthru
        _
      %v310 = vld [vmem:[#allocation2] sm:$0xff]
      %v311 = vld [vmem:[%s271] sm:$0xff]
      %v312 = vpack.c.bf16 %v310, %v310
      %v313 = vld [vmem:[%s281] sm:$0xf]
      %v314 = vld [vmem:[%s281 + $0x4] sm:$0xf]
      %v315 = vld [vmem:[%s281 + $0x8] sm:$0xf]
      %v316 = vld [vmem:[%s281 + $0xc] sm:$0xf]
      %v321 = vunpack.c.l.b16 %v313
      %v322 = vunpack.c.l.b16 %v314
      %v323 = vunpack.c.l.b16 %v315
      %v324 = vunpack.c.l.b16 %v316
      %v325 = vpack.c.b16 %v322, %v321
      %v326 = vpack.c.b16 %v324, %v323
      %vm329 = vcmask 261120
      %v331 = vsel %vm329, %v312, 0
      %333 = vmatprep.subr.bf16.mxu0 0
      %334 = vmatpush1.bf16.msra.mxu0 0
      %335 = vmatprep.subr.bf16.mxu0 0
      %336 = vmatpush1.bf16.msra.mxu0 0
      %337 = vmatprep.subr.bf16.mxu0 0
      %338 = vmatpush1.bf16.msra.mxu0 0
      %339 = vmatprep.subr.bf16.mxu0 0
      %340 = vmatpush1.bf16.msra.mxu0 0
      %341 = vmatprep.subr.bf16.mxu0 0
      %342 = vmatpush1.bf16.msra.mxu0 0
      %343 = vmatprep.subr.bf16.mxu0 0
      %344 = vmatpush1.bf16.msra.mxu0 0
      %345 = vmatprep.subr.bf16.mxu0 0
      %346 = vmatpush1.bf16.msra.mxu0 %v326
      %347 = vmatprep.subr.bf16.mxu0 0
      %348 = vmatpush1.bf16.msra.mxu0 %v325
      %349 = vmatprep.subr.bf16.mxu0 0
      %350 = vmatpush2.bf16.msra.mxu0 0
      %351 = vmatprep.subr.bf16.mxu0 0
      %352 = vmatpush2.bf16.msra.mxu0 0
      %353 = vmatprep.subr.bf16.mxu0 0
      %354 = vmatpush2.bf16.msra.mxu0 0
      %355 = vmatprep.subr.bf16.mxu0 0
      %356 = vmatpush2.bf16.msra.mxu0 0
      %357 = vmatprep.subr.bf16.mxu0 0
      %358 = vmatpush2.bf16.msra.mxu0 0
      %359 = vmatprep.subr.bf16.mxu0 0
      %360 = vmatpush2.bf16.msra.mxu0 0
      %361 = vmatprep.subr.bf16.mxu0 0
      %362 = vmatpush2.bf16.msra.mxu0 0
      %363 = vmatprep.subr.bf16.mxu0 0
      %364 = vmatpush2.bf16.msra.mxu0 0
      %365 = vmatprep.mubr.bf16.mxu0 0
      %366 = vmatmul.mubr.bf16.gmra.mxu0 %v331
      %v367 = vpop.f32.mrf.mxu0
      %v368 = vadd.f32 0.0, %v367
      %v369 = vpop.f32.mrf.mxu0
      %v370 = vpop.f32.mrf.mxu0
      %v371 = vpop.f32.mrf.mxu0
      %372 = vdwg.mxu0
      %v373 = vadd.f32 %v311, %v368
      %v374 = vxor.u32 %v373, 2147483648
      %v375 = vmul.f32 %v374, 1.442695
      %v376 = vpow.pop %v375
      %v377 = vadd.f32 %v376, 1.0
      %v378 = vrcp.pop %v377
      %v379 = vmul.f32 1.0, %v378
      %v380 = vld [vmem:[%s284] sm:$0x1]
      %v382 = vlaneseq
      %v383 = vshrl.u32 %v382, 7
      %v384 = vsub.s32 0, %v383
      %v385 = vrot.slane %v380, %v384
      %386 = vrot.lane.b32.xlu0 %v385, 64
      %v387 = vpop.permute.xlu0 %386
      %v389 = vadd.f32 %v368, %v387
      %391 = vrot.lane.b32.xlu0 %v389, 64
      %v392 = vpop.permute.xlu0 %391
      %v394 = vmul.f32 %v379, %v392
      %396 = vrot.lane.b32.xlu0 %v394, 64
      %v397 = vpop.permute.xlu0 %396
      %v399 = vadd.f32 %v311, %v397
      %v400 = vtanh.pop %v399
      %v401 = vsub.f32 1.0, %v379
      %403 = vrot.lane.b32.xlu0 %v400, 96
      %v404 = vpop.permute.xlu0 %403
      %v406 = vmul.f32 %v401, %v404
      %408 = vrot.lane.b32.xlu0 %v310, 32
      %v409 = vpop.permute.xlu0 %408
      %v411 = vmul.f32 %v379, %v409
      %v412 = vadd.f32 %v406, %v411
      %414 = vrot.lane.b32.xlu0 %v412, 96
      %v415 = vpop.permute.xlu0 %414
      %417 = vst.msk [vmem:[#allocation2] sm:$0xff] %vm329, %v415
      %418 = vst.msk [vmem:[%s297] sm:$0xff] %vm329, %v415
      %s419 = sld [smem:[#allocation4 + %s25]]
      %s420 = smul.u32 %s26, 2
      %s421 = ssub.s32 1, %s420
      %s422 = smul.u32 %s419, %s421
      %s423 = sadd.s32 %s26, %s422
      %p424 = scmp.lt.s32.totalorder %s25, 3
      %s425 = scalar_select %p424, %s25, 3
      %p426 = scmp.lt.s32.totalorder %s423, 1
      %s427 = scalar_select %p426, %s423, 1
      %s428 = smul.addr %s425, 2
      %s429 = sadd.s32 %s427, %s428
      %s430 = smul.addr %s429, 8
      %s431 = scalar_lea.vmem %s4, %s430
      // Predicated region
      $region37: #{enc_network_forward.8} parent=31 // pred_check
        %p432 = pneg %p153
      $region38: #{enc_network_forward.8} parent=31 // pred_check_branch
        %434 = sbr.rel (%p432) target = $region40
      $region39: #{enc_network_forward.8} parent=31 // pred_region
        %s435 = sld [smem:[#allocation4 + %s25]]
        %s436 = smul.u32 %s26, 2
        %s437 = ssub.s32 1, %s436
        %s438 = smul.u32 %s435, %s437
        %s439 = sadd.s32 %s26, %s438
      $region40: #{enc_network_forward.8} parent=31 // pred_fallthru
        _
    $region32: #{enc_network_forward.8} parent=5 // pred_fallthru
      _
    %p440 = scmp.le.s32.totalorder 2, %s16
    // Predicated region
    $region41: #{enc_network_forward.8} parent=5 // pred_check
      %p441 = pneg %p440
    $region42: #{enc_network_forward.8} parent=5 // pred_check_branch
      %443 = sbr.rel (%p441) target = $region44
    $region43: #{enc_network_forward.8} parent=5 // pred_region
      %s444 = ssub.s32 %s16, 2
      // Predicated region
      $region45: #{enc_network_forward.8} parent=43 // pred_check
        %p445 = pneg %p159
      $region46: #{enc_network_forward.8} parent=43 // pred_check_branch
        %447 = sbr.rel (%p445) target = $region48
      $region47: #{enc_network_forward.8} parent=43 // pred_region
        %s448 = sld [smem:[#allocation4 + %s27]]
        %s449 = smul.u32 %s28, 2
        %s450 = ssub.s32 1, %s449
        %s451 = smul.u32 %s448, %s450
        %s452 = sadd.s32 %s28, %s451
        %p453 = scmp.lt.s32.totalorder %s27, 3
        %s454 = scalar_select %p453, %s27, 3
        %p455 = scmp.lt.s32.totalorder %s452, 1
        %s456 = scalar_select %p455, %s452, 1
        %s457 = smul.addr %s454, 2
        %s458 = sadd.s32 %s456, %s457
        %s459 = smul.addr %s458, 8
        %s460 = scalar_lea.vmem %s4, %s459
      $region48: #{enc_network_forward.8} parent=43 // pred_fallthru
        _
    $region44: #{enc_network_forward.8} parent=5 // pred_fallthru
      _
  $region6: #{enc_network_forward.8} parent=0 // loop_footer
    %s20 = sadd.s32 1, %s16
  $region7: #{enc_network_forward.8} parent=0 // loop_footer_branch
    %15 = sbr.rel target = $region3
  $region8: #{enc_network_forward.8} parent=0 // loop_exit
    _

// kernel: enc_network_forward.11
$region0: #{enc_network_forward.11}
  #allocation0 [shape = 'u32[]', space=smem, size = 0x4, offset = 0x4, fixed_abs, tag = 'smem constant byte address 0x4 - core index']
  #allocation1 [shape = 'u32[144,128]{1,0:T(1,128)}', space=vmem, size = 0x12000, scoped, tag = 'internal scratch']
  %s0 = inlined_call_operand.vmem [shape: f32[2,16,32], index: 0, kind: input, shape index: {}]
  %s1 = inlined_call_operand.vmem [shape: bf16[2,32,96], index: 1, kind: input, shape index: {}]
  %s2 = inlined_call_operand.vmem [shape: f32[2,1,96], index: 2, kind: input, shape index: {}]
  %s3 = inlined_call_operand.vmem [shape: f32[2,16,96], index: 3, kind: output, shape index: {}]
  %s4 = sld [smem:[#allocation0]]
  $region45: #{enc_network_forward.11} parent=0
    _
  %s6 = ssub.s32 1, %s4
  %s7 = scalar_select 0, %s6, %s4
  loop: start=0, step=1, limit=4
  $region2: #{enc_network_forward.11} parent=0 // loop_pre_header
    _
  $region3: #{enc_network_forward.11} parent=0 // loop_header
    %s9 = sphi 0, %s13
    %p10 = scmp.ge.s32.totalorder %s9, 4
    %s19 = sphi 0, %s21
    %s22 = sphi 0, %s19
    %s23 = sphi 0, %s22
    %s39 = sphi 0, %s23
    %s45 = sphi 0, %s47
    %s48 = sphi 0, %s45
    %s49 = sphi 0, %s48
    %s65 = sphi 0, %s49
    %s71 = sphi 0, %s73
    %s74 = sphi 0, %s71
    %s75 = sphi 0, %s74
    %s91 = sphi 0, %s75
    %s97 = sphi 0, %s99
    %s100 = sphi 0, %s97
    %s101 = sphi 0, %s100
    %s117 = sphi 0, %s101
  $region4: #{enc_network_forward.11} parent=0 // loop_header_branch
    %12 = sbr.rel (%p10) target = $region8
  $region5: #{enc_network_forward.11} parent=0 // loop_body
    %s14 = ssub.s32 %s9, 1
    %s15 = ssub.s32 %s9, 2
    %s16 = sadd.s32 %s9, 1
    %s17 = ssub.s32 %s9, %s16
    %p18 = scmp.eq.s32.totalorder %s17, 0
    %s20 = sadd.s32 %s19, 1
    %s21 = scalar_select %p18, %s19, %s20
    %p24 = pneg %p18
    %p25 = scmp.eq.s32.totalorder %s9, 1
    %p26 = por %p24, %p25
    %p27 = scmp.ne.s32.totalorder %s19, %s22
    %p28 = scmp.eq.s32.totalorder %s9, 0
    %p29 = por %p27, %p28
    %p30 = scmp.ne.s32.totalorder %s19, %s22
    %p31 = scmp.eq.s32.totalorder %s14, 1
    %p32 = por %p30, %p31
    %p33 = scmp.ne.s32.totalorder %s22, %s23
    %p34 = scmp.eq.s32.totalorder %s14, 0
    %p35 = por %p33, %p34
    %p36 = scmp.ne.s32.totalorder %s22, %s23
    %p37 = scmp.eq.s32.totalorder %s15, 1
    %p38 = por %p36, %p37
    %p40 = scmp.ne.s32.totalorder %s23, %s39
    %p41 = scmp.eq.s32.totalorder %s15, 0
    %p42 = por %p40, %p41
    %s43 = ssub.s32 %s9, %s16
    %p44 = scmp.eq.s32.totalorder %s43, 0
    %s46 = sadd.s32 %s45, 1
    %s47 = scalar_select %p44, %s45, %s46
    %p50 = pneg %p44
    %p51 = scmp.eq.s32.totalorder %s9, 1
    %p52 = por %p50, %p51
    %p53 = scmp.ne.s32.totalorder %s45, %s48
    %p54 = scmp.eq.s32.totalorder %s9, 0
    %p55 = por %p53, %p54
    %p56 = scmp.ne.s32.totalorder %s45, %s48
    %p57 = scmp.eq.s32.totalorder %s14, 1
    %p58 = por %p56, %p57
    %p59 = scmp.ne.s32.totalorder %s48, %s49
    %p60 = scmp.eq.s32.totalorder %s14, 0
    %p61 = por %p59, %p60
    %p62 = scmp.ne.s32.totalorder %s48, %s49
    %p63 = scmp.eq.s32.totalorder %s15, 1
    %p64 = por %p62, %p63
    %p66 = scmp.ne.s32.totalorder %s49, %s65
    %p67 = scmp.eq.s32.totalorder %s15, 0
    %p68 = por %p66, %p67
    %s69 = ssub.s32 %s9, %s16
    %p70 = scmp.eq.s32.totalorder %s69, 0
    %s72 = sadd.s32 %s71, 1
    %s73 = scalar_select %p70, %s71, %s72
    %p76 = pneg %p70
    %p77 = scmp.eq.s32.totalorder %s9, 1
    %p78 = por %p76, %p77
    %p79 = scmp.ne.s32.totalorder %s71, %s74
    %p80 = scmp.eq.s32.totalorder %s9, 0
    %p81 = por %p79, %p80
    %p82 = scmp.ne.s32.totalorder %s71, %s74
    %p83 = scmp.eq.s32.totalorder %s14, 1
    %p84 = por %p82, %p83
    %p85 = scmp.ne.s32.totalorder %s74, %s75
    %p86 = scmp.eq.s32.totalorder %s14, 0
    %p87 = por %p85, %p86
    %p88 = scmp.ne.s32.totalorder %s74, %s75
    %p89 = scmp.eq.s32.totalorder %s15, 1
    %p90 = por %p88, %p89
    %p92 = scmp.ne.s32.totalorder %s75, %s91
    %p93 = scmp.eq.s32.totalorder %s15, 0
    %p94 = por %p92, %p93
    %s95 = ssub.s32 %s9, %s16
    %p96 = scmp.eq.s32.totalorder %s95, 0
    %s98 = sadd.s32 %s97, 1
    %s99 = scalar_select %p96, %s97, %s98
    %p102 = pneg %p96
    %p103 = scmp.eq.s32.totalorder %s9, 1
    %p104 = por %p102, %p103
    %p105 = scmp.ne.s32.totalorder %s97, %s100
    %p106 = scmp.eq.s32.totalorder %s9, 0
    %p107 = por %p105, %p106
    %p108 = scmp.ne.s32.totalorder %s97, %s100
    %p109 = scmp.eq.s32.totalorder %s14, 1
    %p110 = por %p108, %p109
    %p111 = scmp.ne.s32.totalorder %s100, %s101
    %p112 = scmp.eq.s32.totalorder %s14, 0
    %p113 = por %p111, %p112
    %p114 = scmp.ne.s32.totalorder %s100, %s101
    %p115 = scmp.eq.s32.totalorder %s15, 1
    %p116 = por %p114, %p115
    %p118 = scmp.ne.s32.totalorder %s101, %s117
    %p119 = scmp.eq.s32.totalorder %s15, 0
    %p120 = por %p118, %p119
    %p121 = scmp.le.s32.totalorder 1, %s9
    %p122 = scmp.lt.s32.totalorder %s9, 3
    %p123 = pnand %p121, %p122
    %p124 = pneg %p123
    // Predicated region
    $region9: #{enc_network_forward.11} parent=5 // pred_check
      _
    $region10: #{enc_network_forward.11} parent=5 // pred_check_branch
      %126 = sbr.rel (%p123) target = $region12
    $region11: #{enc_network_forward.11} parent=5 // pred_region
      %s127 = ssub.s32 %s9, 1
    $region12: #{enc_network_forward.11} parent=5 // pred_fallthru
      _
    %p128 = scmp.lt.s32.totalorder %s9, 2
    // Predicated region
    $region13: #{enc_network_forward.11} parent=5 // pred_check
      %p129 = pneg %p128
    $region14: #{enc_network_forward.11} parent=5 // pred_check_branch
      %131 = sbr.rel (%p129) target = $region16
    $region15: #{enc_network_forward.11} parent=5 // pred_region
      // Predicated region
      $region17: #{enc_network_forward.11} parent=15 // pred_check
        %p132 = pneg %p29
      $region18: #{enc_network_forward.11} parent=15 // pred_check_branch
        %134 = sbr.rel (%p132) target = $region20
      $region19: #{enc_network_forward.11} parent=15 // pred_region
        %p135 = scmp.lt.s32.totalorder %s9, 1
        %s136 = scalar_select %p135, %s9, 1
        %s137 = smul.addr %s136, 2
        %s138 = smul.addr %s137, 8
        %s139 = scalar_lea.vmem %s0, %s138
      $region20: #{enc_network_forward.11} parent=15 // pred_fallthru
        _
      // Predicated region
      $region21: #{enc_network_forward.11} parent=15 // pred_check
        %p140 = pneg %p55
      $region22: #{enc_network_forward.11} parent=15 // pred_check_branch
        %142 = sbr.rel (%p140) target = $region24
      $region23: #{enc_network_forward.11} parent=15 // pred_region
        %p143 = scmp.lt.s32.totalorder %s9, 1
        %s144 = scalar_select %p143, %s9, 1
        %s145 = smul.addr %s144, 4
        %s146 = smul.addr %s145, 4
        %s147 = scalar_lea.vmem %s1, %s146
      $region24: #{enc_network_forward.11} parent=15 // pred_fallthru
        _
      // Predicated region
      $region25: #{enc_network_forward.11} parent=15 // pred_check
        %p148 = pneg %p81
      $region26: #{enc_network_forward.11} parent=15 // pred_check_branch
        %150 = sbr.rel (%p148) target = $region28
      $region27: #{enc_network_forward.11} parent=15 // pred_region
        %p151 = scmp.lt.s32.totalorder %s9, 1
        %s152 = scalar_select %p151, %s9, 1
        %s153 = scalar_lea.vmem %s2, %s152
      $region28: #{enc_network_forward.11} parent=15 // pred_fallthru
        _
    $region16: #{enc_network_forward.11} parent=5 // pred_fallthru
      _
    %p154 = scmp.le.s32.totalorder 1, %s9
    %p155 = scmp.lt.s32.totalorder %s9, 3
    %p156 = pnand %p154, %p155
    %p157 = pneg %p156
    // Predicated region
    $region29: #{enc_network_forward.11} parent=5 // pred_check
      _
    $region30: #{enc_network_forward.11} parent=5 // pred_check_branch
      %159 = sbr.rel (%p156) target = $region32
    $region31: #{enc_network_forward.11} parent=5 // pred_region
      %s160 = ssub.s32 %s9, 1
      %p161 = scmp.lt.s32.totalorder %s14, 1
      %s162 = scalar_select %p161, %s14, 1
      %s163 = smul.addr %s162, 2
      %s164 = smul.addr %s163, 8
      %s165 = scalar_lea.vmem %s0, %s164
      %p166 = pneg %p35
      %p167 = pneg %p32
      %p168 = scmp.lt.s32.totalorder %s14, 1
      %s169 = scalar_select %p168, %s14, 1
      %s170 = smul.addr %s169, 4
      %s171 = smul.addr %s170, 4
      %s172 = scalar_lea.vmem %s1, %s171
      %p173 = pneg %p61
      %p174 = pneg %p58
      %p175 = scmp.lt.s32.totalorder %s14, 1
      %s176 = scalar_select %p175, %s14, 1
      %s177 = scalar_lea.vmem %s2, %s176
      %p178 = pneg %p87
      %p179 = pneg %p84
      %p180 = pneg %p113
      %p181 = pneg %p110
      %p182 = scmp.lt.s32.totalorder %s14, 1
      %s183 = scalar_select %p182, %s14, 1
      %s184 = smul.addr %s183, 2
      %s185 = smul.addr %s184, 8
      %s186 = scalar_lea.vmem %s3, %s185
      %p187 = scmp.lt.s32.totalorder %s14, 1
      %s188 = scalar_select %p187, %s14, 1
      %s189 = smul.addr %s188, 2
      %s190 = smul.addr %s189, 8
      %s191 = scalar_lea.vmem %s0, %s190
      %p192 = scmp.lt.s32.totalorder %s14, 1
      %s193 = scalar_select %p192, %s14, 1
      %s194 = smul.addr %s193, 4
      %s195 = smul.addr %s194, 4
      %s196 = scalar_lea.vmem %s1, %s195
      %p197 = scmp.lt.s32.totalorder %s14, 1
      %s198 = scalar_select %p197, %s14, 1
      %s199 = scalar_lea.vmem %s2, %s198
      %p200 = scmp.lt.s32.totalorder %s14, 1
      %s201 = scalar_select %p200, %s14, 1
      %s202 = smul.addr %s201, 2
      %s203 = smul.addr %s202, 8
      %s204 = scalar_lea.vmem %s3, %s203
      %v206 = vld [vmem:[%s191] sm:$0xff]
      %v207 = vld [vmem:[%s191 + $0x8] sm:$0xff]
      %v208 = vpack.c.bf16 %v207, %v206
      %v209 = vld [vmem:[%s196] sm:$0xf]
      %v210 = vld [vmem:[%s196 + $0x4] sm:$0xf]
      %v211 = vld [vmem:[%s196 + $0x8] sm:$0xf]
      %v212 = vld [vmem:[%s196 + $0xc] sm:$0xf]
      %v213 = vld [vmem:[%s199] sm:$0x1]
      %v215 = vlaneseq
      %v216 = vshrl.u32 %v215, 7
      %v217 = vsub.s32 0, %v216
      %v218 = vrot.slane %v213, %v217
      %v224 = vunpack.c.l.b16 %v209
      %v225 = vunpack.c.l.b16 %v210
      %v226 = vunpack.c.l.b16 %v211
      %v227 = vunpack.c.l.b16 %v212
      %v228 = vpack.c.b16 %v225, %v224
      %v229 = vpack.c.b16 %v227, %v226
      %vm232 = vcmask 261120
      %v234 = vsel %vm232, %v208, 0
      %236 = vmatprep.subr.bf16.mxu0 0
      %237 = vmatpush1.bf16.msra.mxu0 0
      %238 = vmatprep.subr.bf16.mxu0 0
      %239 = vmatpush1.bf16.msra.mxu0 0
      %240 = vmatprep.subr.bf16.mxu0 0
      %241 = vmatpush1.bf16.msra.mxu0 0
      %242 = vmatprep.subr.bf16.mxu0 0
      %243 = vmatpush1.bf16.msra.mxu0 0
      %244 = vmatprep.subr.bf16.mxu0 0
      %245 = vmatpush1.bf16.msra.mxu0 0
      %246 = vmatprep.subr.bf16.mxu0 0
      %247 = vmatpush1.bf16.msra.mxu0 0
      %248 = vmatprep.subr.bf16.mxu0 0
      %249 = vmatpush1.bf16.msra.mxu0 %v229
      %250 = vmatprep.subr.bf16.mxu0 0
      %251 = vmatpush1.bf16.msra.mxu0 %v228
      %252 = vmatprep.subr.bf16.mxu0 0
      %253 = vmatpush2.bf16.msra.mxu0 0
      %254 = vmatprep.subr.bf16.mxu0 0
      %255 = vmatpush2.bf16.msra.mxu0 0
      %256 = vmatprep.subr.bf16.mxu0 0
      %257 = vmatpush2.bf16.msra.mxu0 0
      %258 = vmatprep.subr.bf16.mxu0 0
      %259 = vmatpush2.bf16.msra.mxu0 0
      %260 = vmatprep.subr.bf16.mxu0 0
      %261 = vmatpush2.bf16.msra.mxu0 0
      %262 = vmatprep.subr.bf16.mxu0 0
      %263 = vmatpush2.bf16.msra.mxu0 0
      %264 = vmatprep.subr.bf16.mxu0 0
      %265 = vmatpush2.bf16.msra.mxu0 0
      %266 = vmatprep.subr.bf16.mxu0 0
      %267 = vmatpush2.bf16.msra.mxu0 0
      %268 = vmatprep.mubr.bf16.mxu0 0
      %269 = vmatmul.mubr.bf16.gmra.mxu0 %v234
      %v270 = vpop.f32.mrf.mxu0
      %v271 = vadd.f32 %v218, %v270
      %v272 = vpop.f32.mrf.mxu0
      %v273 = vpop.f32.mrf.mxu0
      %v274 = vadd.f32 %v218, %v273
      %v275 = vpop.f32.mrf.mxu0
      %276 = vdwg.mxu0
      %vm277 = vcmask 785408
      %278 = vst.msk [vmem:[%s204] sm:$0xff] %vm277, %v271
      %279 = vst.msk [vmem:[%s204 + $0x8] sm:$0xff] %vm277, %v274
      %p280 = scmp.lt.s32.totalorder %s14, 1
      %s281 = scalar_select %p280, %s14, 1
      %s282 = smul.addr %s281, 2
      %s283 = smul.addr %s282, 8
      %s284 = scalar_lea.vmem %s3, %s283
      // Predicated region
      $region33: #{enc_network_forward.11} parent=31 // pred_check
        %p285 = pneg %p110
      $region34: #{enc_network_forward.11} parent=31 // pred_check_branch
        %287 = sbr.rel (%p285) target = $region36
      $region35: #{enc_network_forward.11} parent=31 // pred_region
        _
      $region36: #{enc_network_forward.11} parent=31 // pred_fallthru
        _
    $region32: #{enc_network_forward.11} parent=5 // pred_fallthru
      _
    %p288 = scmp.le.s32.totalorder 2, %s9
    // Predicated region
    $region37: #{enc_network_forward.11} parent=5 // pred_check
      %p289 = pneg %p288
    $region38: #{enc_network_forward.11} parent=5 // pred_check_branch
      %291 = sbr.rel (%p289) target = $region40
    $region39: #{enc_network_forward.11} parent=5 // pred_region
      %s292 = ssub.s32 %s9, 2
      // Predicated region
      $region41: #{enc_network_forward.11} parent=39 // pred_check
        %p293 = pneg %p116
      $region42: #{enc_network_forward.11} parent=39 // pred_check_branch
        %295 = sbr.rel (%p293) target = $region44
      $region43: #{enc_network_forward.11} parent=39 // pred_region
        %p296 = scmp.lt.s32.totalorder %s15, 1
        %s297 = scalar_select %p296, %s15, 1
        %s298 = smul.addr %s297, 2
        %s299 = smul.addr %s298, 8
        %s300 = scalar_lea.vmem %s3, %s299
      $region44: #{enc_network_forward.11} parent=39 // pred_fallthru
        _
    $region40: #{enc_network_forward.11} parent=5 // pred_fallthru
      _
  $region6: #{enc_network_forward.11} parent=0 // loop_footer
    %s13 = sadd.s32 1, %s9
  $region7: #{enc_network_forward.11} parent=0 // loop_footer_branch
    %8 = sbr.rel target = $region3
  $region8: #{enc_network_forward.11} parent=0 // loop_exit
    _

// kernel: enc_network_forward.13
$region0: #{enc_network_forward.13}
  #allocation0 [shape = 'u32[]', space=smem, size = 0x4, offset = 0x4, fixed_abs, tag = 'smem constant byte address 0x4 - core index']
  #allocation1 [shape = 'u32[144,128]{1,0:T(1,128)}', space=vmem, size = 0x12000, scoped, tag = 'internal scratch']
  %s0 = inlined_call_operand.vmem [shape: f32[32,32], index: 0, kind: input, shape index: {}]
  %s1 = inlined_call_operand.vmem [shape: bf16[32,128], index: 1, kind: input, shape index: {}]
  %s2 = inlined_call_operand.vmem [shape: f32[1,128], index: 2, kind: input, shape index: {}]
  %s3 = inlined_call_operand.vmem [shape: f32[32,128], index: 3, kind: output, shape index: {}]
  %s4 = sld [smem:[#allocation0]]
  $region22: #{enc_network_forward.13} parent=0
    _
  %s6 = ssub.s32 1, %s4
  %s7 = scalar_select 0, %s6, %s4
  // Predicated region
  $region2: #{enc_network_forward.13} parent=0 // pred_check
    _
  $region3: #{enc_network_forward.13} parent=0 // pred_check_branch
    %9 = sbr.rel (0) target = $region5
  $region4: #{enc_network_forward.13} parent=0 // pred_region
    _
  $region5: #{enc_network_forward.13} parent=0 // pred_fallthru
    _
  // Predicated region
  $region6: #{enc_network_forward.13} parent=0 // pred_check
    _
  $region7: #{enc_network_forward.13} parent=0 // pred_check_branch
    %11 = sbr.rel (0) target = $region9
  $region8: #{enc_network_forward.13} parent=0 // pred_region
    _
  $region9: #{enc_network_forward.13} parent=0 // pred_fallthru
    _
  // Predicated region
  $region10: #{enc_network_forward.13} parent=0 // pred_check
    _
  $region11: #{enc_network_forward.13} parent=0 // pred_check_branch
    %13 = sbr.rel (0) target = $region13
  $region12: #{enc_network_forward.13} parent=0 // pred_region
    _
  $region13: #{enc_network_forward.13} parent=0 // pred_fallthru
    _
  %v15 = vld [vmem:[%s0] sm:$0xff]
  %v16 = vld [vmem:[%s0 + $0x8] sm:$0xff]
  %v17 = vld [vmem:[%s0 + $0x10] sm:$0xff]
  %v18 = vld [vmem:[%s0 + $0x18] sm:$0xff]
  %v19 = vpack.c.bf16 %v16, %v15
  %v20 = vpack.c.bf16 %v18, %v17
  %v21 = vld [vmem:[%s1] sm:$0xf]
  %v22 = vld [vmem:[%s1 + $0x4] sm:$0xf]
  %v23 = vld [vmem:[%s1 + $0x8] sm:$0xf]
  %v24 = vld [vmem:[%s1 + $0xc] sm:$0xf]
  %v25 = vld [vmem:[%s2] sm:$0x1]
  %v27 = vlaneseq
  %v28 = vshrl.u32 %v27, 7
  %v29 = vsub.s32 0, %v28
  %v30 = vrot.slane %v25, %v29
  %v36 = vunpack.c.l.b16 %v21
  %v37 = vunpack.c.l.b16 %v22
  %v38 = vunpack.c.l.b16 %v23
  %v39 = vunpack.c.l.b16 %v24
  %v40 = vpack.c.b16 %v37, %v36
  %v41 = vpack.c.b16 %v39, %v38
  %vm44 = vcmask 261120
  %v46 = vsel %vm44, %v19, 0
  %v49 = vsel %vm44, %v20, 0
  %51 = vmatprep.subr.bf16.mxu0 0
  %52 = vmatpush1.bf16.msra.mxu0 0
  %53 = vmatprep.subr.bf16.mxu0 0
  %54 = vmatpush1.bf16.msra.mxu0 0
  %55 = vmatprep.subr.bf16.mxu0 0
  %56 = vmatpush1.bf16.msra.mxu0 0
  %57 = vmatprep.subr.bf16.mxu0 0
  %58 = vmatpush1.bf16.msra.mxu0 0
  %59 = vmatprep.subr.bf16.mxu0 0
  %60 = vmatpush1.bf16.msra.mxu0 0
  %61 = vmatprep.subr.bf16.mxu0 0
  %62 = vmatpush1.bf16.msra.mxu0 0
  %63 = vmatprep.subr.bf16.mxu0 0
  %64 = vmatpush1.bf16.msra.mxu0 %v41
  %65 = vmatprep.subr.bf16.mxu0 0
  %66 = vmatpush1.bf16.msra.mxu0 %v40
  %67 = vmatprep.subr.bf16.mxu0 0
  %68 = vmatpush2.bf16.msra.mxu0 0
  %69 = vmatprep.subr.bf16.mxu0 0
  %70 = vmatpush2.bf16.msra.mxu0 0
  %71 = vmatprep.subr.bf16.mxu0 0
  %72 = vmatpush2.bf16.msra.mxu0 0
  %73 = vmatprep.subr.bf16.mxu0 0
  %74 = vmatpush2.bf16.msra.mxu0 0
  %75 = vmatprep.subr.bf16.mxu0 0
  %76 = vmatpush2.bf16.msra.mxu0 0
  %77 = vmatprep.subr.bf16.mxu0 0
  %78 = vmatpush2.bf16.msra.mxu0 0
  %79 = vmatprep.subr.bf16.mxu0 0
  %80 = vmatpush2.bf16.msra.mxu0 0
  %81 = vmatprep.subr.bf16.mxu0 0
  %82 = vmatpush2.bf16.msra.mxu0 0
  %83 = vmatprep.mubr.bf16.mxu0 0
  %84 = vmatmul.mubr.bf16.gmra.mxu0 %v46
  %v85 = vpop.f32.mrf.mxu0
  %v86 = vadd.f32 %v30, %v85
  %v87 = vpop.f32.mrf.mxu0
  %v88 = vpop.f32.mrf.mxu0
  %v89 = vadd.f32 %v30, %v88
  %v90 = vpop.f32.mrf.mxu0
  %91 = vmatprep.mubr.bf16.mxu0 0
  %92 = vmatmul.mubr.bf16.gmra.mxu0 %v49
  %v93 = vpop.f32.mrf.mxu0
  %v94 = vadd.f32 %v30, %v93
  %v95 = vpop.f32.mrf.mxu0
  %v96 = vpop.f32.mrf.mxu0
  %v97 = vadd.f32 %v30, %v96
  %v98 = vpop.f32.mrf.mxu0
  %99 = vdwg.mxu0
  %100 = vst [vmem:[%s3] sm:$0xff] %v86
  %101 = vst [vmem:[%s3 + $0x8] sm:$0xff] %v89
  %102 = vst [vmem:[%s3 + $0x10] sm:$0xff] %v94
  %103 = vst [vmem:[%s3 + $0x18] sm:$0xff] %v97
  // Predicated region
  $region14: #{enc_network_forward.13} parent=0 // pred_check
    _
  $region15: #{enc_network_forward.13} parent=0 // pred_check_branch
    %105 = sbr.rel (0) target = $region17
  $region16: #{enc_network_forward.13} parent=0 // pred_region
    _
  $region17: #{enc_network_forward.13} parent=0 // pred_fallthru
    _
  // Predicated region
  $region18: #{enc_network_forward.13} parent=0 // pred_check
    _
  $region19: #{enc_network_forward.13} parent=0 // pred_check_branch
    %107 = sbr.rel (0) target = $region21
  $region20: #{enc_network_forward.13} parent=0 // pred_region
    _
  $region21: #{enc_network_forward.13} parent=0 // pred_fallthru
    _

// kernel: enc_network_forward.12
$region0: #{enc_network_forward.12}
  #allocation0 [shape = 'u32[]', space=smem, size = 0x4, offset = 0x4, fixed_abs, tag = 'smem constant byte address 0x4 - core index']
  #allocation1 [shape = 'u32[144,128]{1,0:T(1,128)}', space=vmem, size = 0x12000, scoped, tag = 'internal scratch']
  #allocation2 [shape = 'f32[8,32]{1,0:T(8,128)}', space=vmem, size = 0x1000, scoped, tag = 'scratch operand']
  #allocation3 [shape = 's32[1]{0}', space=sflag, size = 0x4, scoped, tag = 'scoped memory for enc_network_forward.12']
  #allocation4 [shape = 'u8[512]{0}', space=smem, size = 0x200, scoped, tag = 'prefetched SMEM operand 0']
  %s0 = inlined_call_operand.vmem [shape: s32[2], index: 0, kind: input, shape index: {}]
  %s1 = inlined_call_operand.vmem [shape: f32[2,2,8,96], index: 1, kind: input, shape index: {}]
  %s2 = inlined_call_operand.vmem [shape: bf16[2,32,96], index: 2, kind: input, shape index: {}]
  %s3 = inlined_call_operand.vmem [shape: f32[2,1,32], index: 3, kind: input, shape index: {}]
  %s4 = inlined_call_operand.vmem [shape: f32[2,2,8,32], index: 4, kind: output, shape index: {}]
  %s5 = sld [smem:[#allocation0]]
  $region49: #{enc_network_forward.12} parent=0
    _
  %s7 = ssub.s32 1, %s5
  %s8 = scalar_select 0, %s7, %s5
  %s9 = sshll.u32 %s0, 4
  %s10 = int_to_ptr.vmem [resolvable:$true] %s9
  %12 = dma.vmem_to_smem %s10, 16, [#allocation4], [#allocation3]
  %13 = dma.done [#allocation3], 16
  %14 = sfence
  loop: start=0, step=1, limit=6
  $region2: #{enc_network_forward.12} parent=0 // loop_pre_header
    _
  $region3: #{enc_network_forward.12} parent=0 // loop_header
    %s16 = sphi 0, %s20
    %p17 = scmp.ge.s32.totalorder %s16, 6
    %s23 = sphi 0, %s35
    %s24 = sphi 0, %s31
    %s25 = sphi 0, %s23
    %s26 = sphi 0, %s24
    %s27 = sphi 0, %s25
    %s28 = sphi 0, %s26
    %s50 = sphi 0, %s52
    %s53 = sphi 0, %s50
    %s54 = sphi 0, %s53
    %s70 = sphi 0, %s54
    %s76 = sphi 0, %s78
    %s79 = sphi 0, %s76
    %s80 = sphi 0, %s79
    %s96 = sphi 0, %s80
    %s102 = sphi 0, %s104
    %s105 = sphi 0, %s102
    %s106 = sphi 0, %s105
    %s122 = sphi 0, %s106
    %s140 = sphi 0, %s142
    %s143 = sphi 0, %s140
    %s144 = sphi 0, %s143
    %s160 = sphi 0, %s144
  $region4: #{enc_network_forward.12} parent=0 // loop_header_branch
    %19 = sbr.rel (%p17) target = $region8
  $region5: #{enc_network_forward.12} parent=0 // loop_body
    %s21 = ssub.s32 %s16, 1
    %s22 = ssub.s32 %s16, 2
    %s29 = sadd.s32 1, %s24
    %p30 = scmp.ge.s32.totalorder %s29, 2
    %s31 = scalar_select %p30, 0, %s29
    %s32 = sadd.s32 1, %s23
    %s33 = scalar_select %p30, %s32, %s23
    %p34 = scmp.ge.s32.totalorder %s33, 2
    %s35 = scalar_select %p34, 0, %s33
    %s36 = sld [smem:[#allocation4 + %s23]]
    %s37 = smul.u32 %s24, 2
    %s38 = ssub.s32 1, %s37
    %s39 = smul.u32 %s36, %s38
    %s40 = sadd.s32 %s24, %s39
    %s41 = sld [smem:[#allocation4 + %s35]]
    %s42 = smul.u32 %s31, 2
    %s43 = ssub.s32 1, %s42
    %s44 = smul.u32 %s41, %s43
    %s45 = sadd.s32 %s31, %s44
    %s46 = ssub.s32 %s23, %s35
    %s47 = ssub.s32 %s40, %s45
    %s48 = sor.u32 %s46, %s47
    %p49 = scmp.eq.s32.totalorder %s48, 0
    %s51 = sadd.s32 %s50, 1
    %s52 = scalar_select %p49, %s50, %s51
    %p55 = pneg %p49
    %p56 = scmp.eq.s32.totalorder %s16, 3
    %p57 = por %p55, %p56
    %p58 = scmp.ne.s32.totalorder %s50, %s53
    %p59 = scmp.eq.s32.totalorder %s16, 0
    %p60 = por %p58, %p59
    %p61 = scmp.ne.s32.totalorder %s50, %s53
    %p62 = scmp.eq.s32.totalorder %s21, 3
    %p63 = por %p61, %p62
    %p64 = scmp.ne.s32.totalorder %s53, %s54
    %p65 = scmp.eq.s32.totalorder %s21, 0
    %p66 = por %p64, %p65
    %p67 = scmp.ne.s32.totalorder %s53, %s54
    %p68 = scmp.eq.s32.totalorder %s22, 3
    %p69 = por %p67, %p68
    %p71 = scmp.ne.s32.totalorder %s54, %s70
    %p72 = scmp.eq.s32.totalorder %s22, 0
    %p73 = por %p71, %p72
    %s74 = ssub.s32 %s23, %s35
    %p75 = scmp.eq.s32.totalorder %s74, 0
    %s77 = sadd.s32 %s76, 1
    %s78 = scalar_select %p75, %s76, %s77
    %p81 = pneg %p75
    %p82 = scmp.eq.s32.totalorder %s16, 3
    %p83 = por %p81, %p82
    %p84 = scmp.ne.s32.totalorder %s76, %s79
    %p85 = scmp.eq.s32.totalorder %s16, 0
    %p86 = por %p84, %p85
    %p87 = scmp.ne.s32.totalorder %s76, %s79
    %p88 = scmp.eq.s32.totalorder %s21, 3
    %p89 = por %p87, %p88
    %p90 = scmp.ne.s32.totalorder %s79, %s80
    %p91 = scmp.eq.s32.totalorder %s21, 0
    %p92 = por %p90, %p91
    %p93 = scmp.ne.s32.totalorder %s79, %s80
    %p94 = scmp.eq.s32.totalorder %s22, 3
    %p95 = por %p93, %p94
    %p97 = scmp.ne.s32.totalorder %s80, %s96
    %p98 = scmp.eq.s32.totalorder %s22, 0
    %p99 = por %p97, %p98
    %s100 = ssub.s32 %s23, %s35
    %p101 = scmp.eq.s32.totalorder %s100, 0
    %s103 = sadd.s32 %s102, 1
    %s104 = scalar_select %p101, %s102, %s103
    %p107 = pneg %p101
    %p108 = scmp.eq.s32.totalorder %s16, 3
    %p109 = por %p107, %p108
    %p110 = scmp.ne.s32.totalorder %s102, %s105
    %p111 = scmp.eq.s32.totalorder %s16, 0
    %p112 = por %p110, %p111
    %p113 = scmp.ne.s32.totalorder %s102, %s105
    %p114 = scmp.eq.s32.totalorder %s21, 3
    %p115 = por %p113, %p114
    %p116 = scmp.ne.s32.totalorder %s105, %s106
    %p117 = scmp.eq.s32.totalorder %s21, 0
    %p118 = por %p116, %p117
    %p119 = scmp.ne.s32.totalorder %s105, %s106
    %p120 = scmp.eq.s32.totalorder %s22, 3
    %p121 = por %p119, %p120
    %p123 = scmp.ne.s32.totalorder %s106, %s122
    %p124 = scmp.eq.s32.totalorder %s22, 0
    %p125 = por %p123, %p124
    %s126 = sld [smem:[#allocation4 + %s23]]
    %s127 = smul.u32 %s24, 2
    %s128 = ssub.s32 1, %s127
    %s129 = smul.u32 %s126, %s128
    %s130 = sadd.s32 %s24, %s129
    %s131 = sld [smem:[#allocation4 + %s35]]
    %s132 = smul.u32 %s31, 2
    %s133 = ssub.s32 1, %s132
    %s134 = smul.u32 %s131, %s133
    %s135 = sadd.s32 %s31, %s134
    %s136 = ssub.s32 %s23, %s35
    %s137 = ssub.s32 %s130, %s135
    %s138 = sor.u32 %s136, %s137
    %p139 = scmp.eq.s32.totalorder %s138, 0
    %s141 = sadd.s32 %s140, 1
    %s142 = scalar_select %p139, %s140, %s141
    %p145 = pneg %p139
    %p146 = scmp.eq.s32.totalorder %s16, 3
    %p147 = por %p145, %p146
    %p148 = scmp.ne.s32.totalorder %s140, %s143
    %p149 = scmp.eq.s32.totalorder %s16, 0
    %p150 = por %p148, %p149
    %p151 = scmp.ne.s32.totalorder %s140, %s143
    %p152 = scmp.eq.s32.totalorder %s21, 3
    %p153 = por %p151, %p152
    %p154 = scmp.ne.s32.totalorder %s143, %s144
    %p155 = scmp.eq.s32.totalorder %s21, 0
    %p156 = por %p154, %p155
    %p157 = scmp.ne.s32.totalorder %s143, %s144
    %p158 = scmp.eq.s32.totalorder %s22, 3
    %p159 = por %p157, %p158
    %p161 = scmp.ne.s32.totalorder %s144, %s160
    %p162 = scmp.eq.s32.totalorder %s22, 0
    %p163 = por %p161, %p162
    %p164 = scmp.le.s32.totalorder 1, %s16
    %p165 = scmp.lt.s32.totalorder %s16, 5
    %p166 = pnand %p164, %p165
    %p167 = pneg %p166
    // Predicated region
    $region9: #{enc_network_forward.12} parent=5 // pred_check
      _
    $region10: #{enc_network_forward.12} parent=5 // pred_check_branch
      %169 = sbr.rel (%p166) target = $region12
    $region11: #{enc_network_forward.12} parent=5 // pred_region
      %s170 = ssub.s32 %s16, 1
    $region12: #{enc_network_forward.12} parent=5 // pred_fallthru
      _
    %p171 = scmp.lt.s32.totalorder %s16, 4
    // Predicated region
    $region13: #{enc_network_forward.12} parent=5 // pred_check
      %p172 = pneg %p171
    $region14: #{enc_network_forward.12} parent=5 // pred_check_branch
      %174 = sbr.rel (%p172) target = $region16
    $region15: #{enc_network_forward.12} parent=5 // pred_region
      // Predicated region
      $region17: #{enc_network_forward.12} parent=15 // pred_check
        %p175 = pneg %p60
      $region18: #{enc_network_forward.12} parent=15 // pred_check_branch
        %177 = sbr.rel (%p175) target = $region20
      $region19: #{enc_network_forward.12} parent=15 // pred_region
        %s178 = sld [smem:[#allocation4 + %s23]]
        %s179 = smul.u32 %s24, 2
        %s180 = ssub.s32 1, %s179
        %s181 = smul.u32 %s178, %s180
        %s182 = sadd.s32 %s24, %s181
        %p183 = scmp.lt.s32.totalorder %s23, 1
        %s184 = scalar_select %p183, %s23, 1
        %p185 = scmp.lt.s32.totalorder %s182, 1
        %s186 = scalar_select %p185, %s182, 1
        %s187 = smul.addr %s184, 2
        %s188 = sadd.s32 %s186, %s187
        %s189 = smul.addr %s188, 8
        %s190 = scalar_lea.vmem %s1, %s189
        %s191 = sld [smem:[#allocation4 + %s23]]
        %s192 = smul.u32 %s24, 2
        %s193 = ssub.s32 1, %s192
        %s194 = smul.u32 %s191, %s193
        %s195 = sadd.s32 %s24, %s194
      $region20: #{enc_network_forward.12} parent=15 // pred_fallthru
        _
      // Predicated region
      $region21: #{enc_network_forward.12} parent=15 // pred_check
        %p196 = pneg %p86
      $region22: #{enc_network_forward.12} parent=15 // pred_check_branch
        %198 = sbr.rel (%p196) target = $region24
      $region23: #{enc_network_forward.12} parent=15 // pred_region
        %p199 = scmp.lt.s32.totalorder %s23, 1
        %s200 = scalar_select %p199, %s23, 1
        %s201 = smul.addr %s200, 4
        %s202 = smul.addr %s201, 4
        %s203 = scalar_lea.vmem %s2, %s202
      $region24: #{enc_network_forward.12} parent=15 // pred_fallthru
        _
      // Predicated region
      $region25: #{enc_network_forward.12} parent=15 // pred_check
        %p204 = pneg %p112
      $region26: #{enc_network_forward.12} parent=15 // pred_check_branch
        %206 = sbr.rel (%p204) target = $region28
      $region27: #{enc_network_forward.12} parent=15 // pred_region
        %p207 = scmp.lt.s32.totalorder %s23, 1
        %s208 = scalar_select %p207, %s23, 1
        %s209 = scalar_lea.vmem %s3, %s208
      $region28: #{enc_network_forward.12} parent=15 // pred_fallthru
        _
    $region16: #{enc_network_forward.12} parent=5 // pred_fallthru
      _
    %p210 = scmp.le.s32.totalorder 1, %s16
    %p211 = scmp.lt.s32.totalorder %s16, 5
    %p212 = pnand %p210, %p211
    %p213 = pneg %p212
    // Predicated region
    $region29: #{enc_network_forward.12} parent=5 // pred_check
      _
    $region30: #{enc_network_forward.12} parent=5 // pred_check_branch
      %215 = sbr.rel (%p212) target = $region32
    $region31: #{enc_network_forward.12} parent=5 // pred_region
      %s216 = ssub.s32 %s16, 1
      %s217 = sld [smem:[#allocation4 + %s25]]
      %s218 = smul.u32 %s26, 2
      %s219 = ssub.s32 1, %s218
      %s220 = smul.u32 %s217, %s219
      %s221 = sadd.s32 %s26, %s220
      %p222 = scmp.lt.s32.totalorder %s25, 1
      %s223 = scalar_select %p222, %s25, 1
      %p224 = scmp.lt.s32.totalorder %s221, 1
      %s225 = scalar_select %p224, %s221, 1
      %s226 = smul.addr %s223, 2
      %s227 = sadd.s32 %s225, %s226
      %s228 = smul.addr %s227, 8
      %s229 = scalar_lea.vmem %s1, %s228
      %p230 = pneg %p66
      %p231 = pneg %p63
      %p232 = scmp.lt.s32.totalorder %s25, 1
      %s233 = scalar_select %p232, %s25, 1
      %s234 = smul.addr %s233, 4
      %s235 = smul.addr %s234, 4
      %s236 = scalar_lea.vmem %s2, %s235
      %p237 = pneg %p92
      %p238 = pneg %p89
      %p239 = scmp.lt.s32.totalorder %s25, 1
      %s240 = scalar_select %p239, %s25, 1
      %s241 = scalar_lea.vmem %s3, %s240
      %p242 = pneg %p118
      %p243 = pneg %p115
      %p244 = pneg %p156
      %p245 = pneg %p153
      %s246 = sld [smem:[#allocation4 + %s25]]
      %s247 = smul.u32 %s26, 2
      %s248 = ssub.s32 1, %s247
      %s249 = smul.u32 %s246, %s248
      %s250 = sadd.s32 %s26, %s249
      %p251 = scmp.lt.s32.totalorder %s25, 1
      %s252 = scalar_select %p251, %s25, 1
      %p253 = scmp.lt.s32.totalorder %s250, 1
      %s254 = scalar_select %p253, %s250, 1
      %s255 = smul.addr %s252, 2
      %s256 = sadd.s32 %s254, %s255
      %s257 = smul.addr %s256, 8
      %s258 = scalar_lea.vmem %s4, %s257
      %s259 = sld [smem:[#allocation4 + %s25]]
      %s260 = smul.u32 %s26, 2
      %s261 = ssub.s32 1, %s260
      %s262 = smul.u32 %s259, %s261
      %s263 = sadd.s32 %s26, %s262
      %p264 = scmp.lt.s32.totalorder %s25, 1
      %s265 = scalar_select %p264, %s25, 1
      %p266 = scmp.lt.s32.totalorder %s263, 1
      %s267 = scalar_select %p266, %s263, 1
      %s268 = smul.addr %s265, 2
      %s269 = sadd.s32 %s267, %s268
      %s270 = smul.addr %s269, 8
      %s271 = scalar_lea.vmem %s1, %s270
      %s272 = sld [smem:[#allocation4 + %s25]]
      %s273 = smul.u32 %s26, 2
      %s274 = ssub.s32 1, %s273
      %s275 = smul.u32 %s272, %s274
      %s276 = sadd.s32 %s26, %s275
      %p277 = scmp.lt.s32.totalorder %s25, 1
      %s278 = scalar_select %p277, %s25, 1
      %s279 = smul.addr %s278, 4
      %s280 = smul.addr %s279, 4
      %s281 = scalar_lea.vmem %s2, %s280
      %p282 = scmp.lt.s32.totalorder %s25, 1
      %s283 = scalar_select %p282, %s25, 1
      %s284 = scalar_lea.vmem %s3, %s283
      %s285 = sld [smem:[#allocation4 + %s25]]
      %s286 = smul.u32 %s26, 2
      %s287 = ssub.s32 1, %s286
      %s288 = smul.u32 %s285, %s287
      %s289 = sadd.s32 %s26, %s288
      %p290 = scmp.lt.s32.totalorder %s25, 1
      %s291 = scalar_select %p290, %s25, 1
      %p292 = scmp.lt.s32.totalorder %s289, 1
      %s293 = scalar_select %p292, %s289, 1
      %s294 = smul.addr %s291, 2
      %s295 = sadd.s32 %s293, %s294
      %s296 = smul.addr %s295, 8
      %s297 = scalar_lea.vmem %s4, %s296
      %s298 = sld [smem:[#allocation4 + %s25]]
      %s299 = smul.u32 %s26, 2
      %s300 = ssub.s32 1, %s299
      %s301 = smul.u32 %s298, %s300
      %s302 = sadd.s32 %s26, %s301
      %p304 = scmp.eq.s32.totalorder %s26, 0
      // Predicated region
      $region33: #{enc_network_forward.12} parent=31 // pred_check
        %p305 = pneg %p304
      $region34: #{enc_network_forward.12} parent=31 // pred_check_branch
        %307 = sbr.rel (%p305) target = $region36
      $region35: #{enc_network_forward.12} parent=31 // pred_region
        %vm308 = vcmask 261120
        %309 = vst.msk [vmem:[#allocation2] sm:$0xff] %vm308, 0.0
      $region36: #{enc_network_forward.12} parent=31 // pred_fallthru
        _
      %v310 = vld [vmem:[#allocation2] sm:$0xff]
      %v311 = vld [vmem:[%s271] sm:$0xff]
      %v312 = vpack.c.bf16 %v310, %v310
      %v313 = vld [vmem:[%s281] sm:$0xf]
      %v314 = vld [vmem:[%s281 + $0x4] sm:$0xf]
      %v315 = vld [vmem:[%s281 + $0x8] sm:$0xf]
      %v316 = vld [vmem:[%s281 + $0xc] sm:$0xf]
      %v321 = vunpack.c.l.b16 %v313
      %v322 = vunpack.c.l.b16 %v314
      %v323 = vunpack.c.l.b16 %v315
      %v324 = vunpack.c.l.b16 %v316
      %v325 = vpack.c.b16 %v322, %v321
      %v326 = vpack.c.b16 %v324, %v323
      %vm329 = vcmask 261120
      %v331 = vsel %vm329, %v312, 0
      %333 = vmatprep.subr.bf16.mxu0 0
      %334 = vmatpush1.bf16.msra.mxu0 0
      %335 = vmatprep.subr.bf16.mxu0 0
      %336 = vmatpush1.bf16.msra.mxu0 0
      %337 = vmatprep.subr.bf16.mxu0 0
      %338 = vmatpush1.bf16.msra.mxu0 0
      %339 = vmatprep.subr.bf16.mxu0 0
      %340 = vmatpush1.bf16.msra.mxu0 0
      %341 = vmatprep.subr.bf16.mxu0 0
      %342 = vmatpush1.bf16.msra.mxu0 0
      %343 = vmatprep.subr.bf16.mxu0 0
      %344 = vmatpush1.bf16.msra.mxu0 0
      %345 = vmatprep.subr.bf16.mxu0 0
      %346 = vmatpush1.bf16.msra.mxu0 %v326
      %347 = vmatprep.subr.bf16.mxu0 0
      %348 = vmatpush1.bf16.msra.mxu0 %v325
      %349 = vmatprep.subr.bf16.mxu0 0
      %350 = vmatpush2.bf16.msra.mxu0 0
      %351 = vmatprep.subr.bf16.mxu0 0
      %352 = vmatpush2.bf16.msra.mxu0 0
      %353 = vmatprep.subr.bf16.mxu0 0
      %354 = vmatpush2.bf16.msra.mxu0 0
      %355 = vmatprep.subr.bf16.mxu0 0
      %356 = vmatpush2.bf16.msra.mxu0 0
      %357 = vmatprep.subr.bf16.mxu0 0
      %358 = vmatpush2.bf16.msra.mxu0 0
      %359 = vmatprep.subr.bf16.mxu0 0
      %360 = vmatpush2.bf16.msra.mxu0 0
      %361 = vmatprep.subr.bf16.mxu0 0
      %362 = vmatpush2.bf16.msra.mxu0 0
      %363 = vmatprep.subr.bf16.mxu0 0
      %364 = vmatpush2.bf16.msra.mxu0 0
      %365 = vmatprep.mubr.bf16.mxu0 0
      %366 = vmatmul.mubr.bf16.gmra.mxu0 %v331
      %v367 = vpop.f32.mrf.mxu0
      %v368 = vadd.f32 0.0, %v367
      %v369 = vpop.f32.mrf.mxu0
      %v370 = vpop.f32.mrf.mxu0
      %v371 = vpop.f32.mrf.mxu0
      %372 = vdwg.mxu0
      %v373 = vadd.f32 %v311, %v368
      %v374 = vxor.u32 %v373, 2147483648
      %v375 = vmul.f32 %v374, 1.442695
      %v376 = vpow.pop %v375
      %v377 = vadd.f32 %v376, 1.0
      %v378 = vrcp.pop %v377
      %v379 = vmul.f32 1.0, %v378
      %v380 = vld [vmem:[%s284] sm:$0x1]
      %v382 = vlaneseq
      %v383 = vshrl.u32 %v382, 7
      %v384 = vsub.s32 0, %v383
      %v385 = vrot.slane %v380, %v384
      %386 = vrot.lane.b32.xlu0 %v385, 64
      %v387 = vpop.permute.xlu0 %386
      %v389 = vadd.f32 %v368, %v387
      %391 = vrot.lane.b32.xlu0 %v389, 64
      %v392 = vpop.permute.xlu0 %391
      %v394 = vmul.f32 %v379, %v392
      %396 = vrot.lane.b32.xlu0 %v394, 64
      %v397 = vpop.permute.xlu0 %396
      %v399 = vadd.f32 %v311, %v397
      %v400 = vtanh.pop %v399
      %v401 = vsub.f32 1.0, %v379
      %403 = vrot.lane.b32.xlu0 %v400, 96
      %v404 = vpop.permute.xlu0 %403
      %v406 = vmul.f32 %v401, %v404
      %408 = vrot.lane.b32.xlu0 %v310, 32
      %v409 = vpop.permute.xlu0 %408
      %v411 = vmul.f32 %v379, %v409
      %v412 = vadd.f32 %v406, %v411
      %414 = vrot.lane.b32.xlu0 %v412, 96
      %v415 = vpop.permute.xlu0 %414
      %417 = vst.msk [vmem:[#allocation2] sm:$0xff] %vm329, %v415
      %418 = vst.msk [vmem:[%s297] sm:$0xff] %vm329, %v415
      %s419 = sld [smem:[#allocation4 + %s25]]
      %s420 = smul.u32 %s26, 2
      %s421 = ssub.s32 1, %s420
      %s422 = smul.u32 %s419, %s421
      %s423 = sadd.s32 %s26, %s422
      %p424 = scmp.lt.s32.totalorder %s25, 1
      %s425 = scalar_select %p424, %s25, 1
      %p426 = scmp.lt.s32.totalorder %s423, 1
      %s427 = scalar_select %p426, %s423, 1
      %s428 = smul.addr %s425, 2
      %s429 = sadd.s32 %s427, %s428
      %s430 = smul.addr %s429, 8
      %s431 = scalar_lea.vmem %s4, %s430
      // Predicated region
      $region37: #{enc_network_forward.12} parent=31 // pred_check
        %p432 = pneg %p153
      $region38: #{enc_network_forward.12} parent=31 // pred_check_branch
        %434 = sbr.rel (%p432) target = $region40
      $region39: #{enc_network_forward.12} parent=31 // pred_region
        %s435 = sld [smem:[#allocation4 + %s25]]
        %s436 = smul.u32 %s26, 2
        %s437 = ssub.s32 1, %s436
        %s438 = smul.u32 %s435, %s437
        %s439 = sadd.s32 %s26, %s438
      $region40: #{enc_network_forward.12} parent=31 // pred_fallthru
        _
    $region32: #{enc_network_forward.12} parent=5 // pred_fallthru
      _
    %p440 = scmp.le.s32.totalorder 2, %s16
    // Predicated region
    $region41: #{enc_network_forward.12} parent=5 // pred_check
      %p441 = pneg %p440
    $region42: #{enc_network_forward.12} parent=5 // pred_check_branch
      %443 = sbr.rel (%p441) target = $region44
    $region43: #{enc_network_forward.12} parent=5 // pred_region
      %s444 = ssub.s32 %s16, 2
      // Predicated region
      $region45: #{enc_network_forward.12} parent=43 // pred_check
        %p445 = pneg %p159
      $region46: #{enc_network_forward.12} parent=43 // pred_check_branch
        %447 = sbr.rel (%p445) target = $region48
      $region47: #{enc_network_forward.12} parent=43 // pred_region
        %s448 = sld [smem:[#allocation4 + %s27]]
        %s449 = smul.u32 %s28, 2
        %s450 = ssub.s32 1, %s449
        %s451 = smul.u32 %s448, %s450
        %s452 = sadd.s32 %s28, %s451
        %p453 = scmp.lt.s32.totalorder %s27, 1
        %s454 = scalar_select %p453, %s27, 1
        %p455 = scmp.lt.s32.totalorder %s452, 1
        %s456 = scalar_select %p455, %s452, 1
        %s457 = smul.addr %s454, 2
        %s458 = sadd.s32 %s456, %s457
        %s459 = smul.addr %s458, 8
        %s460 = scalar_lea.vmem %s4, %s459
      $region48: #{enc_network_forward.12} parent=43 // pred_fallthru
        _
    $region44: #{enc_network_forward.12} parent=5 // pred_fallthru
      _
  $region6: #{enc_network_forward.12} parent=0 // loop_footer
    %s20 = sadd.s32 1, %s16
  $region7: #{enc_network_forward.12} parent=0 // loop_footer_branch
    %15 = sbr.rel target = $region3
  $region8: #{enc_network_forward.12} parent=0 // loop_exit
    _

</llo_original>
